<compile_context>
chip_gen: v6e
topology: v6e:2x2x1
jax: 0.10.0
libtpu: 0.0.40
codegen_flags: <defaults>
</compile_context>

<pallas_src>
import functools

import jax
import jax.numpy as jnp
import numpy as np
from jax.experimental import pallas as pl
from jax.experimental.pallas import tpu as pltpu

DIM = 16          # channels (module default dim=16)
KSIZE = 7
DILATION = 1      # module default
HALO_W = 128      # lane-aligned guard width on each side of the snake scratch
MAX_T_TILE = 8192 # ~3 MiB VMEM footprint -> far below every generation's limit


def _snake(v, c, two_alpha):
    """snake(v) = v + 1/(a+eps)*sin(a v)^2 == v + c - c*cos(2 a v), c = 0.5/(a+eps).

    c and 2*alpha are precomputed host-side (exact divide), so the kernel only does
    one cos (EUP) plus a couple of VPU ops per element.
    """
    return v + c - c * jnp.cos(two_alpha * v)


def _residual_unit_kernel(x_ref, halo_ref, c1_ref, ta1_ref, w1_ref, b1_ref,
                          c2_ref, ta2_ref, w2_ref, b2_ref, out_ref, h1p_ref,
                          *, ksize, dilation, t_chunk, compute_dtype):
    # x_ref:    (1, C, T_TILE)         current time tile (io dtype: f32 or bf16)
    # halo_ref: (1, 1, C, 2*HALO_W)    left/right conv halo embedded in two aligned
    #                                  128-wide slabs (zeros at the sequence edges)
    # c*_ref/ta*_ref/b*_ref: (C, 1) f32  hoisted snake constants / biases
    # w1_ref:   (C, K*C)               weight-normed k=7 conv weight, tap-major fused
    # w2_ref:   (C, C)                 weight-normed 1x1 conv weight
    # out_ref:  (1, C, T_TILE)
    # h1p_ref:  (C, HALO_W + T_TILE + HALO_W) compute-dtype scratch for snake #1
    C = x_ref.shape[1]
    T = x_ref.shape[2]
    pad = (ksize - 1) * dilation // 2
    G = HALO_W
    cdt = compute_dtype

    # tiny per-channel columns / weights, loaded once per tile
    c1, ta1 = c1_ref[...], ta1_ref[...]
    c2, ta2 = c2_ref[...], ta2_ref[...]
    b1, b2 = b1_ref[...], b2_ref[...]
    w2 = w2_ref[...]
    w1f = w1_ref[...]
    wks = [w1f[:, k * C:(k + 1) * C] for k in range(ksize)]     # 7 x (C, C)

    # ---- phase 1: snake #1 written once into the guarded scratch -----------------
    # Center lands at column G (lane-aligned store).  The halo arrives as two
    # 128-wide slabs so the guard stores are aligned & unmasked; only the `pad`
    # columns adjacent to the center are ever read back (snake(0) == 0 at edges).
    hal = halo_ref[0, 0]                                         # (C, 2*HALO_W)
    h1p_ref[:, G:G + T] = _snake(x_ref[0].astype(jnp.float32), c1, ta1).astype(cdt)
    h1p_ref[:, 0:G] = _snake(hal[:, :G].astype(jnp.float32), c1, ta1).astype(cdt)
    h1p_ref[:, G + T:G + T + G] = _snake(
        hal[:, G:].astype(jnp.float32), c1, ta1).astype(cdt)

    # ---- phase 2: conv(k=7) + snake #2 + conv(k=1) + residual, per time chunk ----
    # The 7-tap f32 accumulator for a (C, t_chunk) chunk fits in vregs, so the conv
    # costs 7 lane-offset VMEM reads + 7 small MXU contractions and zero extra
    # vector stores (no materialized im2col operand).
    for ci in range(T // t_chunk):
        base = G + ci * t_chunk                                   # 128-aligned
        acc = jnp.dot(wks[0], h1p_ref[:, pl.ds(base - pad, t_chunk)],
                      preferred_element_type=jnp.float32)
        for k in range(1, ksize):
            off = base + k * dilation - pad
            acc = acc + jnp.dot(wks[k], h1p_ref[:, pl.ds(off, t_chunk)],
                                preferred_element_type=jnp.float32)
        h2 = _snake(acc + b1, c2, ta2).astype(cdt)
        y = jnp.dot(w2, h2, preferred_element_type=jnp.float32) + b2
        xc = x_ref[0, :, pl.ds(ci * t_chunk, t_chunk)].astype(jnp.float32)
        out_ref[0, :, pl.ds(ci * t_chunk, t_chunk)] = (xc + y).astype(out_ref.dtype)


def _round_down_128(v):
    return (v // 128) * 128


def _pick_t_tile(T, N):
    """Largest lane-dense time tile <= MAX_T_TILE that divides T (and keeps >=2
    grid steps when N == 1 so both megacore TensorCores get work)."""
    max_tile = MAX_T_TILE
    if N == 1 and T >= 256:
        max_tile = min(max_tile, max(128, _round_down_128(T // 2)))
    if T <= max_tile:
        return T
    for cand in range(_round_down_128(min(max_tile, T)), 127, -128):
        if T % cand == 0:
            return cand
    # TODO(synk): mask a ragged final tile instead of falling back to one full-T block.
    return T


def _pick_t_chunk(t_tile):
    """In-kernel chunk width: largest multiple of 128 <= 512 that divides the tile."""
    for cand in range(min(512, _round_down_128(t_tile)), 127, -128):
        if t_tile % cand == 0:
            return cand
    return t_tile


def _build_halos(x, t_tile, pad):
    """(N, nt, C, 2*HALO_W): +-pad conv neighbours of every tile, embedded in two
    lane-aligned 128-wide slabs (left halo in the LAST pad cols of slab 0, right
    halo in the FIRST pad cols of slab 1; zeros at the sequence edges). Only ~3%
    extra HBM traffic at an 8K tile, and every kernel-side store stays aligned."""
    N, C, T = x.shape
    nt = T // t_tile
    x4 = x.reshape(N, C, nt, t_tile)
    zp = jnp.zeros((N, C, 1, pad), x.dtype)
    left = jnp.concatenate([zp, x4[:, :, :-1, t_tile - pad:]], axis=2)   # (N,C,nt,pad)
    right = jnp.concatenate([x4[:, :, 1:, :pad], zp], axis=2)            # (N,C,nt,pad)
    zg = jnp.zeros((N, C, nt, HALO_W - pad), x.dtype)
    halos = jnp.concatenate([zg, left, right, zg], axis=-1)              # (N,C,nt,2*HW)
    return halos.transpose(0, 2, 1, 3)                                   # (N,nt,C,2*HW)


def residual_unit(x, alpha1, w1, b1, alpha2, w2, b2, *, dilation=DILATION,
                  io_dtype=None, compute_dtype=jnp.bfloat16, t_tile=None):
    """x: (N, C, T). Weights already weight-normalized (w1: (C,C,7), w2: (C,C,1)).

    io_dtype:      dtype of activation HBM traffic (bf16 halves HBM bytes).
    compute_dtype: dtype of MXU operands (bf16 default even for f32 I/O); snake
                   math, bias, accumulation and the residual add are always f32.
    """
    N, C, T = x.shape
    ksize = w1.shape[-1]
    pad = (ksize - 1) * dilation // 2
    if io_dtype is None:
        io_dtype = x.dtype
    if t_tile is None:
        t_tile = _pick_t_tile(T, N)
    assert T % t_tile == 0, "T must be a multiple of the time tile"
    assert 0 < pad <= min(t_tile, HALO_W)
    nt = T // t_tile
    t_chunk = _pick_t_chunk(t_tile)

    # In a real model activations already arrive in io_dtype; this cast is demo-only.
    xc = x.astype(io_dtype)
    halos = _build_halos(xc, t_tile, pad)                       # (N, nt, C, 2*HALO_W)

    # Fused tap-major k=7 weight: w1f[o, k*C + i] = w1[o, i, k]
    w1f = jnp.transpose(w1, (0, 2, 1)).reshape(C, ksize * C).astype(compute_dtype)
    w2m = w2.reshape(C, C).astype(compute_dtype)
    # Hoisted snake constants (exact divide host-side -> no approx reciprocal in-kernel)
    c1 = (0.5 / (alpha1 + 1e-9)).reshape(C, 1).astype(jnp.float32)
    ta1 = (2.0 * alpha1).reshape(C, 1).astype(jnp.float32)
    c2 = (0.5 / (alpha2 + 1e-9)).reshape(C, 1).astype(jnp.float32)
    ta2 = (2.0 * alpha2).reshape(C, 1).astype(jnp.float32)
    b1c = b1.reshape(C, 1).astype(jnp.float32)
    b2c = b2.reshape(C, 1).astype(jnp.float32)

    # Footprint-derived VMEM budget (capped at 48 MiB -> safe on v7x's 64 MiB VMEM).
    io_b = jnp.dtype(io_dtype).itemsize
    cd_b = jnp.dtype(compute_dtype).itemsize
    footprint = (2 * 2 * C * t_tile * io_b            # double-buffered x / out blocks
                 + 2 * C * 2 * HALO_W * io_b          # double-buffered halo blocks
                 + C * (t_tile + 2 * HALO_W) * cd_b   # snake scratch
                 + (1 << 16))
    vmem_limit = int(min(48 * 1024 * 1024, max(32 * 1024 * 1024, 2 * footprint)))

    kernel = functools.partial(_residual_unit_kernel, ksize=ksize, dilation=dilation,
                               t_chunk=t_chunk, compute_dtype=compute_dtype)

    out = pl.pallas_call(
        kernel,
        out_shape=jax.ShapeDtypeStruct((N, C, T), io_dtype),
        grid_spec=pltpu.PrefetchScalarGridSpec(
            num_scalar_prefetch=0,
            grid=(N, nt),
            in_specs=[
                pl.BlockSpec((1, C, t_tile), lambda n, t: (n, 0, t)),           # x tile
                pl.BlockSpec((1, 1, C, 2 * HALO_W), lambda n, t: (n, t, 0, 0)), # halos
                pl.BlockSpec((C, 1), lambda n, t: (0, 0)),                      # c1
                pl.BlockSpec((C, 1), lambda n, t: (0, 0)),                      # 2*alpha1
                pl.BlockSpec((C, ksize * C), lambda n, t: (0, 0)),              # w1 fused
                pl.BlockSpec((C, 1), lambda n, t: (0, 0)),                      # b1
                pl.BlockSpec((C, 1), lambda n, t: (0, 0)),                      # c2
                pl.BlockSpec((C, 1), lambda n, t: (0, 0)),                      # 2*alpha2
                pl.BlockSpec((C, C), lambda n, t: (0, 0)),                      # w2
                pl.BlockSpec((C, 1), lambda n, t: (0, 0)),                      # b2
            ],
            out_specs=pl.BlockSpec((1, C, t_tile), lambda n, t: (n, 0, t)),
            scratch_shapes=[
                pltpu.VMEM((C, HALO_W + t_tile + HALO_W), compute_dtype),       # snake #1
            ],
        ),
        compiler_params=pltpu.CompilerParams(
            dimension_semantics=("parallel", "parallel"),
            vmem_limit_bytes=vmem_limit,
        ),
    )(xc, halos, c1, ta1, w1f, b1c, c2, ta2, w2m, b2c)

    # Residual trim (pad = (T - T_y)//2) is a no-op: 'same' padding keeps T_y == T.
    return out


def _weight_norm(v, g):
    # PyTorch weight_norm(Conv1d) default dim=0: per-output-channel norm over (in, k)
    norm = jnp.sqrt(jnp.sum(v * v, axis=(1, 2), keepdims=True))
    return g * v / norm


def _ref_forward(x, alpha1, w1, b1, alpha2, w2, b2, *, dilation=DILATION):
    pad = (w1.shape[-1] - 1) * dilation // 2

    def snake_ref(v, alpha):
        return v + (1.0 / (alpha + 1e-9)) * jnp.sin(alpha * v) ** 2

    h = snake_ref(x, alpha1[None, :, None])
    y = jax.lax.conv_general_dilated(
        h, w1, window_strides=(1,), padding=[(pad, pad)],
        rhs_dilation=(dilation,), dimension_numbers=("NCH", "OIH", "NCH"),
        precision=jax.lax.Precision.HIGHEST)
    y = y + b1[None, :, None]
    y = snake_ref(y, alpha2[None, :, None])
    y = jax.lax.conv_general_dilated(
        y, w2, window_strides=(1,), padding=[(0, 0)],
        dimension_numbers=("NCH", "OIH", "NCH"),
        precision=jax.lax.Precision.HIGHEST)
    y = y + b2[None, :, None]
    return x + y


if __name__ == "__main__":
    key = jax.random.PRNGKey(0)
    k_x, k_v1, k_g1, k_b1, k_v2, k_g2, k_b2 = jax.random.split(key, 7)

    # Small shapes; T=1024 with t_tile=128 -> grid (2, 8) so interior + edge halos
    # of the tiled conv and the chunked inner loop are exercised.
    N, C, T = 2, DIM, 1024
    x = jax.random.normal(k_x, (N, C, T), dtype=jnp.float32)

    alpha1 = jnp.ones((C,), jnp.float32)                               # Snake1d(dim)
    v1 = 0.1 * jax.random.normal(k_v1, (C, C, KSIZE), jnp.float32)     # Conv1d(dim,dim,7)
    g1 = 1.0 + 0.1 * jax.random.normal(k_g1, (C, 1, 1), jnp.float32)   # weight_norm g
    b1 = 0.1 * jax.random.normal(k_b1, (C,), jnp.float32)
    alpha2 = jnp.ones((C,), jnp.float32)                               # Snake1d(dim)
    v2 = 0.1 * jax.random.normal(k_v2, (C, C, 1), jnp.float32)         # Conv1d(dim,dim,1)
    g2 = 1.0 + 0.1 * jax.random.normal(k_g2, (C, 1, 1), jnp.float32)
    b2 = 0.1 * jax.random.normal(k_b2, (C,), jnp.float32)

    w1 = _weight_norm(v1, g1)   # (C, C, 7)
    w2 = _weight_norm(v2, g2)   # (C, C, 1)

    ref = _ref_forward(x, alpha1, w1, b1, alpha2, w2, b2, dilation=DILATION)

    # --- exact path: f32 compute + f32 I/O, small tile to exercise inter-tile halos ---
    out_f32 = residual_unit(x, alpha1, w1, b1, alpha2, w2, b2, dilation=DILATION,
                            compute_dtype=jnp.float32, t_tile=128)
    out_f32 = jax.block_until_ready(out_f32)
    np.testing.assert_allclose(np.asarray(out_f32), np.asarray(ref),
                               rtol=1e-3, atol=1e-3)

    # --- default fast path: bf16 MXU operands + bf16 activation I/O, auto tile ---
    out_bf16 = residual_unit(x, alpha1, w1, b1, alpha2, w2, b2, dilation=DILATION,
                             io_dtype=jnp.bfloat16)
    out_bf16 = jax.block_until_ready(out_bf16).astype(jnp.float32)
    # Fair comparison: reference on bf16-quantized x / weights.  The kernel further
    # rounds h1/h2 (and the halo) to bf16 before the MXU -- a deliberate numerics
    # choice absorbed by the looser tolerance.
    xq = x.astype(jnp.bfloat16).astype(jnp.float32)
    w1q = w1.astype(jnp.bfloat16).astype(jnp.float32)
    w2q = w2.astype(jnp.bfloat16).astype(jnp.float32)
    ref_q = _ref_forward(xq, alpha1, w1q, b1, alpha2, w2q, b2, dilation=DILATION)
    np.testing.assert_allclose(np.asarray(out_bf16), np.asarray(ref_q),
                               rtol=3e-2, atol=3e-2)

    print("KERNEL_OK")
</pallas_src>

<mosaic_0001>
module attributes {stable_mosaic.version = 11 : i64} {
  func.func @_residual_unit_kernel(%arg0: i32, %arg1: i32, %arg2: memref<1x16x128xf32, #tpu.memory_space<vmem>>, %arg3: memref<1x1x16x256xf32, #tpu.memory_space<vmem>>, %arg4: memref<16x1xf32, #tpu.memory_space<vmem>>, %arg5: memref<16x1xf32, #tpu.memory_space<vmem>>, %arg6: memref<16x112xf32, #tpu.memory_space<vmem>>, %arg7: memref<16x1xf32, #tpu.memory_space<vmem>>, %arg8: memref<16x1xf32, #tpu.memory_space<vmem>>, %arg9: memref<16x1xf32, #tpu.memory_space<vmem>>, %arg10: memref<16x16xf32, #tpu.memory_space<vmem>>, %arg11: memref<16x1xf32, #tpu.memory_space<vmem>>, %arg12: memref<1x16x128xf32, #tpu.memory_space<vmem>>, %arg13: memref<16x384xf32, #tpu.memory_space<vmem>>) attributes {dimension_semantics = [#tpu.dimension_semantics<parallel>, #tpu.dimension_semantics<parallel>], iteration_bounds = array<i64: 2, 8>, scalar_prefetch = 0 : i64, scratch_operands = 1 : i64, tpu.core_type = #tpu.core_type<tc>, window_params = [{transform_indices = @transform_0, window_bounds = array<i64: 1, 16, 128>}, {transform_indices = @transform_1, window_bounds = array<i64: 1, 1, 16, 256>}, {pipeline_mode = #tpu.pipeline_mode<synchronous>, transform_indices = @transform_2, window_bounds = array<i64: 16, 1>}, {pipeline_mode = #tpu.pipeline_mode<synchronous>, transform_indices = @transform_3, window_bounds = array<i64: 16, 1>}, {pipeline_mode = #tpu.pipeline_mode<synchronous>, transform_indices = @transform_4, window_bounds = array<i64: 16, 112>}, {pipeline_mode = #tpu.pipeline_mode<synchronous>, transform_indices = @transform_5, window_bounds = array<i64: 16, 1>}, {pipeline_mode = #tpu.pipeline_mode<synchronous>, transform_indices = @transform_6, window_bounds = array<i64: 16, 1>}, {pipeline_mode = #tpu.pipeline_mode<synchronous>, transform_indices = @transform_7, window_bounds = array<i64: 16, 1>}, {pipeline_mode = #tpu.pipeline_mode<synchronous>, transform_indices = @transform_8, window_bounds = array<i64: 16, 16>}, {pipeline_mode = #tpu.pipeline_mode<synchronous>, transform_indices = @transform_9, window_bounds = array<i64: 16, 1>}, {transform_indices = @transform_10, window_bounds = array<i64: 1, 16, 128>}]} {
    %c0 = arith.constant 0 : index
    %c0_0 = arith.constant 0 : index
    %0 = vector.load %arg4[%c0, %c0_0] : memref<16x1xf32, #tpu.memory_space<vmem>>, vector<16x1xf32>
    %c0_1 = arith.constant 0 : index
    %c0_2 = arith.constant 0 : index
    %1 = vector.load %arg5[%c0_1, %c0_2] : memref<16x1xf32, #tpu.memory_space<vmem>>, vector<16x1xf32>
    %c0_3 = arith.constant 0 : index
    %c0_4 = arith.constant 0 : index
    %2 = vector.load %arg8[%c0_3, %c0_4] : memref<16x1xf32, #tpu.memory_space<vmem>>, vector<16x1xf32>
    %c0_5 = arith.constant 0 : index
    %c0_6 = arith.constant 0 : index
    %3 = vector.load %arg9[%c0_5, %c0_6] : memref<16x1xf32, #tpu.memory_space<vmem>>, vector<16x1xf32>
    %c0_7 = arith.constant 0 : index
    %c0_8 = arith.constant 0 : index
    %4 = vector.load %arg7[%c0_7, %c0_8] : memref<16x1xf32, #tpu.memory_space<vmem>>, vector<16x1xf32>
    %c0_9 = arith.constant 0 : index
    %c0_10 = arith.constant 0 : index
    %5 = vector.load %arg11[%c0_9, %c0_10] : memref<16x1xf32, #tpu.memory_space<vmem>>, vector<16x1xf32>
    %c0_11 = arith.constant 0 : index
    %c0_12 = arith.constant 0 : index
    %6 = vector.load %arg10[%c0_11, %c0_12] : memref<16x16xf32, #tpu.memory_space<vmem>>, vector<16x16xf32>
    %c0_13 = arith.constant 0 : index
    %c0_14 = arith.constant 0 : index
    %7 = vector.load %arg6[%c0_13, %c0_14] : memref<16x112xf32, #tpu.memory_space<vmem>>, vector<16x112xf32>
    %8 = vector.extract_strided_slice %7 {offsets = [0, 0], sizes = [16, 16], strides = [1, 1]} : vector<16x112xf32> to vector<16x16xf32>
    %9 = vector.extract_strided_slice %7 {offsets = [0, 16], sizes = [16, 16], strides = [1, 1]} : vector<16x112xf32> to vector<16x16xf32>
    %10 = vector.extract_strided_slice %7 {offsets = [0, 32], sizes = [16, 16], strides = [1, 1]} : vector<16x112xf32> to vector<16x16xf32>
    %11 = vector.extract_strided_slice %7 {offsets = [0, 48], sizes = [16, 16], strides = [1, 1]} : vector<16x112xf32> to vector<16x16xf32>
    %12 = vector.extract_strided_slice %7 {offsets = [0, 64], sizes = [16, 16], strides = [1, 1]} : vector<16x112xf32> to vector<16x16xf32>
    %13 = vector.extract_strided_slice %7 {offsets = [0, 80], sizes = [16, 16], strides = [1, 1]} : vector<16x112xf32> to vector<16x16xf32>
    %14 = vector.extract_strided_slice %7 {offsets = [0, 96], sizes = [16, 16], strides = [1, 1]} : vector<16x112xf32> to vector<16x16xf32>
    %c0_15 = arith.constant 0 : index
    %c0_16 = arith.constant 0 : index
    %c0_17 = arith.constant 0 : index
    %c0_18 = arith.constant 0 : index
    %15 = vector.load %arg3[%c0_15, %c0_16, %c0_17, %c0_18] : memref<1x1x16x256xf32, #tpu.memory_space<vmem>>, vector<1x1x16x256xf32>
    %16 = vector.shape_cast %15 : vector<1x1x16x256xf32> to vector<16x256xf32>
    %c0_19 = arith.constant 0 : index
    %c0_20 = arith.constant 0 : index
    %c0_21 = arith.constant 0 : index
    %17 = vector.load %arg2[%c0_19, %c0_20, %c0_21] : memref<1x16x128xf32, #tpu.memory_space<vmem>>, vector<1x16x128xf32>
    %18 = vector.shape_cast %17 : vector<1x16x128xf32> to vector<16x128xf32>
    %19 = vector.broadcast %0 : vector<16x1xf32> to vector<16x128xf32>
    %20 = arith.addf %18, %19 : vector<16x128xf32>
    %21 = vector.broadcast %1 : vector<16x1xf32> to vector<16x128xf32>
    %22 = arith.mulf %21, %18 : vector<16x128xf32>
    %23 = math.cos %22 : vector<16x128xf32>
    %24 = vector.broadcast %0 : vector<16x1xf32> to vector<16x128xf32>
    %25 = arith.mulf %24, %23 : vector<16x128xf32>
    %26 = arith.subf %20, %25 : vector<16x128xf32>
    %c0_22 = arith.constant 0 : index
    %c128 = arith.constant 128 : index
    %27 = vector.load %arg13[%c0_22, %c128] : memref<16x384xf32, #tpu.memory_space<vmem>>, vector<16x128xf32>
    tpu.vector_store %arg13[%c0_22, %c128], %26 {strides = array<i32>} : memref<16x384xf32, #tpu.memory_space<vmem>>, vector<16x128xf32>,
    %28 = vector.extract_strided_slice %16 {offsets = [0, 0], sizes = [16, 128], strides = [1, 1]} : vector<16x256xf32> to vector<16x128xf32>
    %29 = vector.broadcast %0 : vector<16x1xf32> to vector<16x128xf32>
    %30 = arith.addf %28, %29 : vector<16x128xf32>
    %31 = vector.broadcast %1 : vector<16x1xf32> to vector<16x128xf32>
    %32 = arith.mulf %31, %28 : vector<16x128xf32>
    %33 = math.cos %32 : vector<16x128xf32>
    %34 = vector.broadcast %0 : vector<16x1xf32> to vector<16x128xf32>
    %35 = arith.mulf %34, %33 : vector<16x128xf32>
    %36 = arith.subf %30, %35 : vector<16x128xf32>
    %c0_23 = arith.constant 0 : index
    %c0_24 = arith.constant 0 : index
    %37 = vector.load %arg13[%c0_23, %c0_24] : memref<16x384xf32, #tpu.memory_space<vmem>>, vector<16x128xf32>
    tpu.vector_store %arg13[%c0_23, %c0_24], %36 {strides = array<i32>} : memref<16x384xf32, #tpu.memory_space<vmem>>, vector<16x128xf32>,
    %38 = vector.extract_strided_slice %16 {offsets = [0, 128], sizes = [16, 128], strides = [1, 1]} : vector<16x256xf32> to vector<16x128xf32>
    %39 = vector.broadcast %0 : vector<16x1xf32> to vector<16x128xf32>
    %40 = arith.addf %38, %39 : vector<16x128xf32>
    %41 = vector.broadcast %1 : vector<16x1xf32> to vector<16x128xf32>
    %42 = arith.mulf %41, %38 : vector<16x128xf32>
    %43 = math.cos %42 : vector<16x128xf32>
    %44 = vector.broadcast %0 : vector<16x1xf32> to vector<16x128xf32>
    %45 = arith.mulf %44, %43 : vector<16x128xf32>
    %46 = arith.subf %40, %45 : vector<16x128xf32>
    %c0_25 = arith.constant 0 : index
    %c256 = arith.constant 256 : index
    %47 = vector.load %arg13[%c0_25, %c256] : memref<16x384xf32, #tpu.memory_space<vmem>>, vector<16x128xf32>
    tpu.vector_store %arg13[%c0_25, %c256], %46 {strides = array<i32>} : memref<16x384xf32, #tpu.memory_space<vmem>>, vector<16x128xf32>,
    %c0_26 = arith.constant 0 : index
    %c125 = arith.constant 125 : index
    %48 = vector.load %arg13[%c0_26, %c125] : memref<16x384xf32, #tpu.memory_space<vmem>>, vector<16x128xf32>
    %cst = arith.constant dense<0.000000e+00> : vector<16x128xf32>
    %49 = tpu.matmul %8, %48, %cst {dimension_numbers = #tpu.dot_dimension_numbers<[1], [0], [0], [1], [0, 0, 1, 1], [], []>} : vector<16x16xf32>, vector<16x128xf32>, vector<16x128xf32> -> vector<16x128xf32>
    %c0_27 = arith.constant 0 : index
    %c126 = arith.constant 126 : index
    %50 = vector.load %arg13[%c0_27, %c126] : memref<16x384xf32, #tpu.memory_space<vmem>>, vector<16x128xf32>
    %cst_28 = arith.constant dense<0.000000e+00> : vector<16x128xf32>
    %51 = tpu.matmul %9, %50, %cst_28 {dimension_numbers = #tpu.dot_dimension_numbers<[1], [0], [0], [1], [0, 0, 1, 1], [], []>} : vector<16x16xf32>, vector<16x128xf32>, vector<16x128xf32> -> vector<16x128xf32>
    %52 = arith.addf %49, %51 : vector<16x128xf32>
    %c0_29 = arith.constant 0 : index
    %c127 = arith.constant 127 : index
    %53 = vector.load %arg13[%c0_29, %c127] : memref<16x384xf32, #tpu.memory_space<vmem>>, vector<16x128xf32>
    %cst_30 = arith.constant dense<0.000000e+00> : vector<16x128xf32>
    %54 = tpu.matmul %10, %53, %cst_30 {dimension_numbers = #tpu.dot_dimension_numbers<[1], [0], [0], [1], [0, 0, 1, 1], [], []>} : vector<16x16xf32>, vector<16x128xf32>, vector<16x128xf32> -> vector<16x128xf32>
    %55 = arith.addf %52, %54 : vector<16x128xf32>
    %c0_31 = arith.constant 0 : index
    %c128_32 = arith.constant 128 : index
    %56 = vector.load %arg13[%c0_31, %c128_32] : memref<16x384xf32, #tpu.memory_space<vmem>>, vector<16x128xf32>
    %cst_33 = arith.constant dense<0.000000e+00> : vector<16x128xf32>
    %57 = tpu.matmul %11, %56, %cst_33 {dimension_numbers = #tpu.dot_dimension_numbers<[1], [0], [0], [1], [0, 0, 1, 1], [], []>} : vector<16x16xf32>, vector<16x128xf32>, vector<16x128xf32> -> vector<16x128xf32>
    %58 = arith.addf %55, %57 : vector<16x128xf32>
    %c0_34 = arith.constant 0 : index
    %c129 = arith.constant 129 : index
    %59 = vector.load %arg13[%c0_34, %c129] : memref<16x384xf32, #tpu.memory_space<vmem>>, vector<16x128xf32>
    %cst_35 = arith.constant dense<0.000000e+00> : vector<16x128xf32>
    %60 = tpu.matmul %12, %59, %cst_35 {dimension_numbers = #tpu.dot_dimension_numbers<[1], [0], [0], [1], [0, 0, 1, 1], [], []>} : vector<16x16xf32>, vector<16x128xf32>, vector<16x128xf32> -> vector<16x128xf32>
    %61 = arith.addf %58, %60 : vector<16x128xf32>
    %c0_36 = arith.constant 0 : index
    %c130 = arith.constant 130 : index
    %62 = vector.load %arg13[%c0_36, %c130] : memref<16x384xf32, #tpu.memory_space<vmem>>, vector<16x128xf32>
    %cst_37 = arith.constant dense<0.000000e+00> : vector<16x128xf32>
    %63 = tpu.matmul %13, %62, %cst_37 {dimension_numbers = #tpu.dot_dimension_numbers<[1], [0], [0], [1], [0, 0, 1, 1], [], []>} : vector<16x16xf32>, vector<16x128xf32>, vector<16x128xf32> -> vector<16x128xf32>
    %64 = arith.addf %61, %63 : vector<16x128xf32>
    %c0_38 = arith.constant 0 : index
    %c131 = arith.constant 131 : index
    %65 = vector.load %arg13[%c0_38, %c131] : memref<16x384xf32, #tpu.memory_space<vmem>>, vector<16x128xf32>
    %cst_39 = arith.constant dense<0.000000e+00> : vector<16x128xf32>
    %66 = tpu.matmul %14, %65, %cst_39 {dimension_numbers = #tpu.dot_dimension_numbers<[1], [0], [0], [1], [0, 0, 1, 1], [], []>} : vector<16x16xf32>, vector<16x128xf32>, vector<16x128xf32> -> vector<16x128xf32>
    %67 = arith.addf %64, %66 : vector<16x128xf32>
    %68 = vector.broadcast %4 : vector<16x1xf32> to vector<16x128xf32>
    %69 = arith.addf %67, %68 : vector<16x128xf32>
    %70 = vector.broadcast %2 : vector<16x1xf32> to vector<16x128xf32>
    %71 = arith.addf %69, %70 : vector<16x128xf32>
    %72 = vector.broadcast %3 : vector<16x1xf32> to vector<16x128xf32>
    %73 = arith.mulf %72, %69 : vector<16x128xf32>
    %74 = math.cos %73 : vector<16x128xf32>
    %75 = vector.broadcast %2 : vector<16x1xf32> to vector<16x128xf32>
    %76 = arith.mulf %75, %74 : vector<16x128xf32>
    %77 = arith.subf %71, %76 : vector<16x128xf32>
    %cst_40 = arith.constant dense<0.000000e+00> : vector<16x128xf32>
    %78 = tpu.matmul %6, %77, %cst_40 {dimension_numbers = #tpu.dot_dimension_numbers<[1], [0], [0], [1], [0, 0, 1, 1], [], []>} : vector<16x16xf32>, vector<16x128xf32>, vector<16x128xf32> -> vector<16x128xf32>
    %79 = vector.broadcast %5 : vector<16x1xf32> to vector<16x128xf32>
    %80 = arith.addf %78, %79 : vector<16x128xf32>
    %c0_41 = arith.constant 0 : index
    %c0_42 = arith.constant 0 : index
    %c0_43 = arith.constant 0 : index
    %81 = vector.load %arg2[%c0_41, %c0_42, %c0_43] : memref<1x16x128xf32, #tpu.memory_space<vmem>>, vector<1x16x128xf32>
    %82 = vector.shape_cast %81 : vector<1x16x128xf32> to vector<16x128xf32>
    %83 = arith.addf %82, %80 : vector<16x128xf32>
    %c0_44 = arith.constant 0 : index
    %c0_45 = arith.constant 0 : index
    %c0_46 = arith.constant 0 : index
    %84 = vector.load %arg12[%c0_44, %c0_45, %c0_46] : memref<1x16x128xf32, #tpu.memory_space<vmem>>, vector<1x16x128xf32>
    %85 = vector.shape_cast %84 : vector<1x16x128xf32> to vector<16x128xf32>
    %86 = vector.shape_cast %83 : vector<16x128xf32> to vector<1x16x128xf32>
    tpu.vector_store %arg12[%c0_44, %c0_45, %c0_46], %86 {strides = array<i32>} : memref<1x16x128xf32, #tpu.memory_space<vmem>>, vector<1x16x128xf32>,
    return
  }
  func.func @transform_0(%arg0: i32, %arg1: i32) -> (i32, i32, i32) {
    %c0_i32 = arith.constant 0 : i32
    %c0_i32_0 = arith.constant 0 : i32
    return %arg0, %c0_i32, %arg1 : i32, i32, i32
  }
  func.func @transform_1(%arg0: i32, %arg1: i32) -> (i32, i32, i32, i32) {
    %c0_i32 = arith.constant 0 : i32
    %c0_i32_0 = arith.constant 0 : i32
    %c0_i32_1 = arith.constant 0 : i32
    return %arg0, %arg1, %c0_i32, %c0_i32_0 : i32, i32, i32, i32
  }
  func.func @transform_2(%arg0: i32, %arg1: i32) -> (i32, i32) {
    %c0_i32 = arith.constant 0 : i32
    %c0_i32_0 = arith.constant 0 : i32
    %c0_i32_1 = arith.constant 0 : i32
    return %c0_i32, %c0_i32_0 : i32, i32
  }
  func.func @transform_3(%arg0: i32, %arg1: i32) -> (i32, i32) {
    %c0_i32 = arith.constant 0 : i32
    %c0_i32_0 = arith.constant 0 : i32
    %c0_i32_1 = arith.constant 0 : i32
    return %c0_i32, %c0_i32_0 : i32, i32
  }
  func.func @transform_4(%arg0: i32, %arg1: i32) -> (i32, i32) {
    %c0_i32 = arith.constant 0 : i32
    %c0_i32_0 = arith.constant 0 : i32
    %c0_i32_1 = arith.constant 0 : i32
    return %c0_i32, %c0_i32_0 : i32, i32
  }
  func.func @transform_5(%arg0: i32, %arg1: i32) -> (i32, i32) {
    %c0_i32 = arith.constant 0 : i32
    %c0_i32_0 = arith.constant 0 : i32
    %c0_i32_1 = arith.constant 0 : i32
    return %c0_i32, %c0_i32_0 : i32, i32
  }
  func.func @transform_6(%arg0: i32, %arg1: i32) -> (i32, i32) {
    %c0_i32 = arith.constant 0 : i32
    %c0_i32_0 = arith.constant 0 : i32
    %c0_i32_1 = arith.constant 0 : i32
    return %c0_i32, %c0_i32_0 : i32, i32
  }
  func.func @transform_7(%arg0: i32, %arg1: i32) -> (i32, i32) {
    %c0_i32 = arith.constant 0 : i32
    %c0_i32_0 = arith.constant 0 : i32
    %c0_i32_1 = arith.constant 0 : i32
    return %c0_i32, %c0_i32_0 : i32, i32
  }
  func.func @transform_8(%arg0: i32, %arg1: i32) -> (i32, i32) {
    %c0_i32 = arith.constant 0 : i32
    %c0_i32_0 = arith.constant 0 : i32
    %c0_i32_1 = arith.constant 0 : i32
    return %c0_i32, %c0_i32_0 : i32, i32
  }
  func.func @transform_9(%arg0: i32, %arg1: i32) -> (i32, i32) {
    %c0_i32 = arith.constant 0 : i32
    %c0_i32_0 = arith.constant 0 : i32
    %c0_i32_1 = arith.constant 0 : i32
    return %c0_i32, %c0_i32_0 : i32, i32
  }
  func.func @transform_10(%arg0: i32, %arg1: i32) -> (i32, i32, i32) {
    %c0_i32 = arith.constant 0 : i32
    %c0_i32_0 = arith.constant 0 : i32
    return %arg0, %c0_i32, %arg1 : i32, i32, i32
  }
}

</mosaic_0001>

<llo_original>
// kernel: tpu_custom_call.1
$region0: #{tpu_custom_call.1}
  #allocation0 [shape = 'u32[]', space=smem, size = 0x4, offset = 0x4, fixed_abs, tag = 'smem constant byte address 0x4 - core index']
  #allocation1 [shape = 'u32[144,128]{1,0:T(1,128)}', space=vmem, size = 0x12000, scoped, tag = 'internal scratch']
  #allocation2 [shape = 'f32[16,384]{1,0:T(8,128)}', space=vmem, size = 0x6000, scoped, tag = 'scratch operand']
  %s0 = inlined_call_operand.hbm [shape: f32[2,16,1024], index: 0, kind: input, shape index: {}]
  %s1 = inlined_call_operand.hbm [shape: f32[2,8,16,256], index: 1, kind: input, shape index: {}]
  %s2 = inlined_call_operand.vmem [shape: f32[16,1], index: 2, kind: input, shape index: {}]
  %s3 = inlined_call_operand.vmem [shape: f32[16,1], index: 3, kind: input, shape index: {}]
  %s4 = inlined_call_operand.vmem [shape: f32[16,112], index: 4, kind: input, shape index: {}]
  %s5 = inlined_call_operand.vmem [shape: f32[16,1], index: 5, kind: input, shape index: {}]
  %s6 = inlined_call_operand.vmem [shape: f32[16,1], index: 6, kind: input, shape index: {}]
  %s7 = inlined_call_operand.vmem [shape: f32[16,1], index: 7, kind: input, shape index: {}]
  %s8 = inlined_call_operand.vmem [shape: f32[16,16], index: 8, kind: input, shape index: {}]
  %s9 = inlined_call_operand.vmem [shape: f32[16,1], index: 9, kind: input, shape index: {}]
  %s10 = inlined_call_operand.hbm [shape: f32[2,16,1024], index: 10, kind: output, shape index: {}]
  %s11 = sld [smem:[#allocation0]]
  $region81: #{tpu_custom_call.1} parent=0
    _
  %s13 = ssub.s32 1, %s11
  %s14 = scalar_select 0, %s13, %s11
  $region1: #{tpu_custom_call.1} parent=0
    #allocation3 [shape = 'u8[16384]{0}', space=vmem, size = 0x4000, scoped, tag = 'input window, operand 0']
    #allocation4 [shape = 's32[2]{0}', space=sflag, size = 0x8, scoped, tag = 'scoped memory for tpu_custom_call.1']
    #allocation5 [shape = 's32[2]{0}', space=sflag, size = 0x8, scoped, tag = 'scoped memory for tpu_custom_call.1']
    #allocation6 [shape = 'u8[32768]{0}', space=vmem, size = 0x8000, scoped, tag = 'input window, operand 1']
    #allocation7 [shape = 's32[2]{0}', space=sflag, size = 0x8, scoped, tag = 'scoped memory for tpu_custom_call.1']
    #allocation8 [shape = 'u8[16384]{0}', space=vmem, size = 0x4000, scoped, tag = 'output window, operand 0']
    %15 = vsyncpa [#allocation4], 0
    %s16 = scalar_lea.sflag [#allocation4], 1
    %17 = vsyncpa %s16, 0
    %18 = vsyncpa [#allocation7], 0
    %s19 = scalar_lea.sflag [#allocation7], 1
    %20 = vsyncpa %s19, 0
    %21 = vsyncpa [#allocation5], 0
    %s22 = scalar_lea.sflag [#allocation5], 1
    %23 = vsyncpa %s22, 0
    loop: start=0, step=1, limit=18
    $region2: #{tpu_custom_call.1} parent=1 // loop_pre_header
      _
    $region3: #{tpu_custom_call.1} parent=1 // loop_header
      %s25 = sphi 0, %s29
      %p26 = scmp.ge.s32.totalorder %s25, 18
      %s32 = sphi 0, %s44
      %s33 = sphi 0, %s40
      %s34 = sphi 0, %s32
      %s35 = sphi 0, %s33
      %s36 = sphi 0, %s34
      %s37 = sphi 0, %s35
      %s49 = sphi 0, %s51
      %s52 = sphi 0, %s49
      %s53 = sphi 0, %s52
      %s69 = sphi 0, %s53
      %s77 = sphi 0, %s79
      %s80 = sphi 0, %s77
      %s81 = sphi 0, %s80
      %s97 = sphi 0, %s81
      %s101 = sphi 0, %s101
      %s103 = sphi 0, %s101
      %s104 = sphi 0, %s103
      %s118 = sphi 0, %s104
      %s122 = sphi 0, %s122
      %s124 = sphi 0, %s122
      %s125 = sphi 0, %s124
      %s139 = sphi 0, %s125
      %s143 = sphi 0, %s143
      %s145 = sphi 0, %s143
      %s146 = sphi 0, %s145
      %s160 = sphi 0, %s146
      %s164 = sphi 0, %s164
      %s166 = sphi 0, %s164
      %s167 = sphi 0, %s166
      %s181 = sphi 0, %s167
      %s185 = sphi 0, %s185
      %s187 = sphi 0, %s185
      %s188 = sphi 0, %s187
      %s202 = sphi 0, %s188
      %s206 = sphi 0, %s206
      %s208 = sphi 0, %s206
      %s209 = sphi 0, %s208
      %s223 = sphi 0, %s209
      %s227 = sphi 0, %s227
      %s229 = sphi 0, %s227
      %s230 = sphi 0, %s229
      %s244 = sphi 0, %s230
      %s248 = sphi 0, %s248
      %s250 = sphi 0, %s248
      %s251 = sphi 0, %s250
      %s265 = sphi 0, %s251
      %s273 = sphi 0, %s275
      %s276 = sphi 0, %s273
      %s277 = sphi 0, %s276
      %s293 = sphi 0, %s277
    $region4: #{tpu_custom_call.1} parent=1 // loop_header_branch
      %28 = sbr.rel (%p26) target = $region8
    $region5: #{tpu_custom_call.1} parent=1 // loop_body
      %s30 = ssub.s32 %s25, 1
      %s31 = ssub.s32 %s25, 2
      %s38 = sadd.s32 1, %s33
      %p39 = scmp.ge.s32.totalorder %s38, 8
      %s40 = scalar_select %p39, 0, %s38
      %s41 = sadd.s32 1, %s32
      %s42 = scalar_select %p39, %s41, %s32
      %p43 = scmp.ge.s32.totalorder %s42, 2
      %s44 = scalar_select %p43, 0, %s42
      %s45 = ssub.s32 %s32, %s44
      %s46 = ssub.s32 %s33, %s40
      %s47 = sor.u32 %s45, %s46
      %p48 = scmp.eq.s32.totalorder %s47, 0
      %s50 = sadd.s32 %s49, 1
      %s51 = scalar_select %p48, %s49, %s50
      %p54 = pneg %p48
      %p55 = scmp.eq.s32.totalorder %s25, 15
      %p56 = por %p54, %p55
      %p57 = scmp.ne.s32.totalorder %s49, %s52
      %p58 = scmp.eq.s32.totalorder %s25, 0
      %p59 = por %p57, %p58
      %p60 = scmp.ne.s32.totalorder %s49, %s52
      %p61 = scmp.eq.s32.totalorder %s30, 15
      %p62 = por %p60, %p61
      %p63 = scmp.ne.s32.totalorder %s52, %s53
      %p64 = scmp.eq.s32.totalorder %s30, 0
      %p65 = por %p63, %p64
      %p66 = scmp.ne.s32.totalorder %s52, %s53
      %p67 = scmp.eq.s32.totalorder %s31, 15
      %p68 = por %p66, %p67
      %p70 = scmp.ne.s32.totalorder %s53, %s69
      %p71 = scmp.eq.s32.totalorder %s31, 0
      %p72 = por %p70, %p71
      %s73 = ssub.s32 %s32, %s44
      %s74 = ssub.s32 %s33, %s40
      %s75 = sor.u32 %s73, %s74
      %p76 = scmp.eq.s32.totalorder %s75, 0
      %s78 = sadd.s32 %s77, 1
      %s79 = scalar_select %p76, %s77, %s78
      %p82 = pneg %p76
      %p83 = scmp.eq.s32.totalorder %s25, 15
      %p84 = por %p82, %p83
      %p85 = scmp.ne.s32.totalorder %s77, %s80
      %p86 = scmp.eq.s32.totalorder %s25, 0
      %p87 = por %p85, %p86
      %p88 = scmp.ne.s32.totalorder %s77, %s80
      %p89 = scmp.eq.s32.totalorder %s30, 15
      %p90 = por %p88, %p89
      %p91 = scmp.ne.s32.totalorder %s80, %s81
      %p92 = scmp.eq.s32.totalorder %s30, 0
      %p93 = por %p91, %p92
      %p94 = scmp.ne.s32.totalorder %s80, %s81
      %p95 = scmp.eq.s32.totalorder %s31, 15
      %p96 = por %p94, %p95
      %p98 = scmp.ne.s32.totalorder %s81, %s97
      %p99 = scmp.eq.s32.totalorder %s31, 0
      %p100 = por %p98, %p99
      %s102 = sadd.s32 %s101, 1
      %p105 = scmp.eq.s32.totalorder %s25, 15
      %p106 = scmp.ne.s32.totalorder %s101, %s103
      %p107 = scmp.eq.s32.totalorder %s25, 0
      %p108 = por %p106, %p107
      %p109 = scmp.ne.s32.totalorder %s101, %s103
      %p110 = scmp.eq.s32.totalorder %s30, 15
      %p111 = por %p109, %p110
      %p112 = scmp.ne.s32.totalorder %s103, %s104
      %p113 = scmp.eq.s32.totalorder %s30, 0
      %p114 = por %p112, %p113
      %p115 = scmp.ne.s32.totalorder %s103, %s104
      %p116 = scmp.eq.s32.totalorder %s31, 15
      %p117 = por %p115, %p116
      %p119 = scmp.ne.s32.totalorder %s104, %s118
      %p120 = scmp.eq.s32.totalorder %s31, 0
      %p121 = por %p119, %p120
      %s123 = sadd.s32 %s122, 1
      %p126 = scmp.eq.s32.totalorder %s25, 15
      %p127 = scmp.ne.s32.totalorder %s122, %s124
      %p128 = scmp.eq.s32.totalorder %s25, 0
      %p129 = por %p127, %p128
      %p130 = scmp.ne.s32.totalorder %s122, %s124
      %p131 = scmp.eq.s32.totalorder %s30, 15
      %p132 = por %p130, %p131
      %p133 = scmp.ne.s32.totalorder %s124, %s125
      %p134 = scmp.eq.s32.totalorder %s30, 0
      %p135 = por %p133, %p134
      %p136 = scmp.ne.s32.totalorder %s124, %s125
      %p137 = scmp.eq.s32.totalorder %s31, 15
      %p138 = por %p136, %p137
      %p140 = scmp.ne.s32.totalorder %s125, %s139
      %p141 = scmp.eq.s32.totalorder %s31, 0
      %p142 = por %p140, %p141
      %s144 = sadd.s32 %s143, 1
      %p147 = scmp.eq.s32.totalorder %s25, 15
      %p148 = scmp.ne.s32.totalorder %s143, %s145
      %p149 = scmp.eq.s32.totalorder %s25, 0
      %p150 = por %p148, %p149
      %p151 = scmp.ne.s32.totalorder %s143, %s145
      %p152 = scmp.eq.s32.totalorder %s30, 15
      %p153 = por %p151, %p152
      %p154 = scmp.ne.s32.totalorder %s145, %s146
      %p155 = scmp.eq.s32.totalorder %s30, 0
      %p156 = por %p154, %p155
      %p157 = scmp.ne.s32.totalorder %s145, %s146
      %p158 = scmp.eq.s32.totalorder %s31, 15
      %p159 = por %p157, %p158
      %p161 = scmp.ne.s32.totalorder %s146, %s160
      %p162 = scmp.eq.s32.totalorder %s31, 0
      %p163 = por %p161, %p162
      %s165 = sadd.s32 %s164, 1
      %p168 = scmp.eq.s32.totalorder %s25, 15
      %p169 = scmp.ne.s32.totalorder %s164, %s166
      %p170 = scmp.eq.s32.totalorder %s25, 0
      %p171 = por %p169, %p170
      %p172 = scmp.ne.s32.totalorder %s164, %s166
      %p173 = scmp.eq.s32.totalorder %s30, 15
      %p174 = por %p172, %p173
      %p175 = scmp.ne.s32.totalorder %s166, %s167
      %p176 = scmp.eq.s32.totalorder %s30, 0
      %p177 = por %p175, %p176
      %p178 = scmp.ne.s32.totalorder %s166, %s167
      %p179 = scmp.eq.s32.totalorder %s31, 15
      %p180 = por %p178, %p179
      %p182 = scmp.ne.s32.totalorder %s167, %s181
      %p183 = scmp.eq.s32.totalorder %s31, 0
      %p184 = por %p182, %p183
      %s186 = sadd.s32 %s185, 1
      %p189 = scmp.eq.s32.totalorder %s25, 15
      %p190 = scmp.ne.s32.totalorder %s185, %s187
      %p191 = scmp.eq.s32.totalorder %s25, 0
      %p192 = por %p190, %p191
      %p193 = scmp.ne.s32.totalorder %s185, %s187
      %p194 = scmp.eq.s32.totalorder %s30, 15
      %p195 = por %p193, %p194
      %p196 = scmp.ne.s32.totalorder %s187, %s188
      %p197 = scmp.eq.s32.totalorder %s30, 0
      %p198 = por %p196, %p197
      %p199 = scmp.ne.s32.totalorder %s187, %s188
      %p200 = scmp.eq.s32.totalorder %s31, 15
      %p201 = por %p199, %p200
      %p203 = scmp.ne.s32.totalorder %s188, %s202
      %p204 = scmp.eq.s32.totalorder %s31, 0
      %p205 = por %p203, %p204
      %s207 = sadd.s32 %s206, 1
      %p210 = scmp.eq.s32.totalorder %s25, 15
      %p211 = scmp.ne.s32.totalorder %s206, %s208
      %p212 = scmp.eq.s32.totalorder %s25, 0
      %p213 = por %p211, %p212
      %p214 = scmp.ne.s32.totalorder %s206, %s208
      %p215 = scmp.eq.s32.totalorder %s30, 15
      %p216 = por %p214, %p215
      %p217 = scmp.ne.s32.totalorder %s208, %s209
      %p218 = scmp.eq.s32.totalorder %s30, 0
      %p219 = por %p217, %p218
      %p220 = scmp.ne.s32.totalorder %s208, %s209
      %p221 = scmp.eq.s32.totalorder %s31, 15
      %p222 = por %p220, %p221
      %p224 = scmp.ne.s32.totalorder %s209, %s223
      %p225 = scmp.eq.s32.totalorder %s31, 0
      %p226 = por %p224, %p225
      %s228 = sadd.s32 %s227, 1
      %p231 = scmp.eq.s32.totalorder %s25, 15
      %p232 = scmp.ne.s32.totalorder %s227, %s229
      %p233 = scmp.eq.s32.totalorder %s25, 0
      %p234 = por %p232, %p233
      %p235 = scmp.ne.s32.totalorder %s227, %s229
      %p236 = scmp.eq.s32.totalorder %s30, 15
      %p237 = por %p235, %p236
      %p238 = scmp.ne.s32.totalorder %s229, %s230
      %p239 = scmp.eq.s32.totalorder %s30, 0
      %p240 = por %p238, %p239
      %p241 = scmp.ne.s32.totalorder %s229, %s230
      %p242 = scmp.eq.s32.totalorder %s31, 15
      %p243 = por %p241, %p242
      %p245 = scmp.ne.s32.totalorder %s230, %s244
      %p246 = scmp.eq.s32.totalorder %s31, 0
      %p247 = por %p245, %p246
      %s249 = sadd.s32 %s248, 1
      %p252 = scmp.eq.s32.totalorder %s25, 15
      %p253 = scmp.ne.s32.totalorder %s248, %s250
      %p254 = scmp.eq.s32.totalorder %s25, 0
      %p255 = por %p253, %p254
      %p256 = scmp.ne.s32.totalorder %s248, %s250
      %p257 = scmp.eq.s32.totalorder %s30, 15
      %p258 = por %p256, %p257
      %p259 = scmp.ne.s32.totalorder %s250, %s251
      %p260 = scmp.eq.s32.totalorder %s30, 0
      %p261 = por %p259, %p260
      %p262 = scmp.ne.s32.totalorder %s250, %s251
      %p263 = scmp.eq.s32.totalorder %s31, 15
      %p264 = por %p262, %p263
      %p266 = scmp.ne.s32.totalorder %s251, %s265
      %p267 = scmp.eq.s32.totalorder %s31, 0
      %p268 = por %p266, %p267
      %s269 = ssub.s32 %s32, %s44
      %s270 = ssub.s32 %s33, %s40
      %s271 = sor.u32 %s269, %s270
      %p272 = scmp.eq.s32.totalorder %s271, 0
      %s274 = sadd.s32 %s273, 1
      %s275 = scalar_select %p272, %s273, %s274
      %p278 = pneg %p272
      %p279 = scmp.eq.s32.totalorder %s25, 15
      %p280 = por %p278, %p279
      %p281 = scmp.ne.s32.totalorder %s273, %s276
      %p282 = scmp.eq.s32.totalorder %s25, 0
      %p283 = por %p281, %p282
      %p284 = scmp.ne.s32.totalorder %s273, %s276
      %p285 = scmp.eq.s32.totalorder %s30, 15
      %p286 = por %p284, %p285
      %p287 = scmp.ne.s32.totalorder %s276, %s277
      %p288 = scmp.eq.s32.totalorder %s30, 0
      %p289 = por %p287, %p288
      %p290 = scmp.ne.s32.totalorder %s276, %s277
      %p291 = scmp.eq.s32.totalorder %s31, 15
      %p292 = por %p290, %p291
      %p294 = scmp.ne.s32.totalorder %s277, %s293
      %p295 = scmp.eq.s32.totalorder %s31, 0
      %p296 = por %p294, %p295
      %p297 = scmp.le.s32.totalorder 1, %s25
      %p298 = scmp.lt.s32.totalorder %s25, 17
      %p299 = pnand %p297, %p298
      %p300 = pneg %p299
      // Predicated region
      $region9: #{tpu_custom_call.1} parent=5 // pred_check
        _
      $region10: #{tpu_custom_call.1} parent=5 // pred_check_branch
        %302 = sbr.rel (%p299) target = $region12
      $region11: #{tpu_custom_call.1} parent=5 // pred_region
        %s303 = ssub.s32 %s25, 1
        // Predicated region
        $region13: #{tpu_custom_call.1} parent=11 // pred_check
          %p304 = pneg %p114
        $region14: #{tpu_custom_call.1} parent=11 // pred_check_branch
          %306 = sbr.rel (%p304) target = $region16
        $region15: #{tpu_custom_call.1} parent=11 // pred_region
          _
        $region16: #{tpu_custom_call.1} parent=11 // pred_fallthru
          _
        // Predicated region
        $region17: #{tpu_custom_call.1} parent=11 // pred_check
          %p307 = pneg %p135
        $region18: #{tpu_custom_call.1} parent=11 // pred_check_branch
          %309 = sbr.rel (%p307) target = $region20
        $region19: #{tpu_custom_call.1} parent=11 // pred_region
          _
        $region20: #{tpu_custom_call.1} parent=11 // pred_fallthru
          _
        // Predicated region
        $region21: #{tpu_custom_call.1} parent=11 // pred_check
          %p310 = pneg %p156
        $region22: #{tpu_custom_call.1} parent=11 // pred_check_branch
          %312 = sbr.rel (%p310) target = $region24
        $region23: #{tpu_custom_call.1} parent=11 // pred_region
          _
        $region24: #{tpu_custom_call.1} parent=11 // pred_fallthru
          _
        // Predicated region
        $region25: #{tpu_custom_call.1} parent=11 // pred_check
          %p313 = pneg %p177
        $region26: #{tpu_custom_call.1} parent=11 // pred_check_branch
          %315 = sbr.rel (%p313) target = $region28
        $region27: #{tpu_custom_call.1} parent=11 // pred_region
          _
        $region28: #{tpu_custom_call.1} parent=11 // pred_fallthru
          _
        // Predicated region
        $region29: #{tpu_custom_call.1} parent=11 // pred_check
          %p316 = pneg %p198
        $region30: #{tpu_custom_call.1} parent=11 // pred_check_branch
          %318 = sbr.rel (%p316) target = $region32
        $region31: #{tpu_custom_call.1} parent=11 // pred_region
          _
        $region32: #{tpu_custom_call.1} parent=11 // pred_fallthru
          _
        // Predicated region
        $region33: #{tpu_custom_call.1} parent=11 // pred_check
          %p319 = pneg %p219
        $region34: #{tpu_custom_call.1} parent=11 // pred_check_branch
          %321 = sbr.rel (%p319) target = $region36
        $region35: #{tpu_custom_call.1} parent=11 // pred_region
          _
        $region36: #{tpu_custom_call.1} parent=11 // pred_fallthru
          _
        // Predicated region
        $region37: #{tpu_custom_call.1} parent=11 // pred_check
          %p322 = pneg %p240
        $region38: #{tpu_custom_call.1} parent=11 // pred_check_branch
          %324 = sbr.rel (%p322) target = $region40
        $region39: #{tpu_custom_call.1} parent=11 // pred_region
          _
        $region40: #{tpu_custom_call.1} parent=11 // pred_fallthru
          _
        // Predicated region
        $region41: #{tpu_custom_call.1} parent=11 // pred_check
          %p325 = pneg %p261
        $region42: #{tpu_custom_call.1} parent=11 // pred_check_branch
          %327 = sbr.rel (%p325) target = $region44
        $region43: #{tpu_custom_call.1} parent=11 // pred_region
          _
        $region44: #{tpu_custom_call.1} parent=11 // pred_fallthru
          _
      $region12: #{tpu_custom_call.1} parent=5 // pred_fallthru
        _
      %p328 = scmp.lt.s32.totalorder %s25, 16
      // Predicated region
      $region45: #{tpu_custom_call.1} parent=5 // pred_check
        %p329 = pneg %p328
      $region46: #{tpu_custom_call.1} parent=5 // pred_check_branch
        %331 = sbr.rel (%p329) target = $region48
      $region47: #{tpu_custom_call.1} parent=5 // pred_region
        // Predicated region
        $region49: #{tpu_custom_call.1} parent=47 // pred_check
          %p332 = pneg %p59
        $region50: #{tpu_custom_call.1} parent=47 // pred_check_branch
          %334 = sbr.rel (%p332) target = $region52
        $region51: #{tpu_custom_call.1} parent=47 // pred_region
          %s335 = sand.u32 %s49, 1
          %s336 = scalar_lea.sflag [#allocation4], %s335
          %s337 = sand.u32 %s49, 1
          %s338 = smul.addr %s337, 16
          %s339 = scalar_lea.vmem [#allocation3], %s338
          %s341 = ssub.s32 256, 256
          %342 = vsyncadd %s336, %s341
          %s343 = smul.addr %s32, 16
          %s344 = sadd.s32 %s33, %s343
          %s345 = smul.addr %s344, 128
          %s346 = scalar_lea.hbm %s0, %s345
          %s347 = sshll.u32 %s339, 4
          %s348 = int_to_ptr.vmem [resolvable:$true] %s347
          %353 = dma.hbm_to_vmem [thread:$0]  %s346, 256, %s348, %s336, 1024, 128, 8
        $region52: #{tpu_custom_call.1} parent=47 // pred_fallthru
          _
        // Predicated region
        $region53: #{tpu_custom_call.1} parent=47 // pred_check
          %p354 = pneg %p87
        $region54: #{tpu_custom_call.1} parent=47 // pred_check_branch
          %356 = sbr.rel (%p354) target = $region56
        $region55: #{tpu_custom_call.1} parent=47 // pred_region
          %s357 = sand.u32 %s77, 1
          %s358 = scalar_lea.sflag [#allocation7], %s357
          %s359 = sand.u32 %s77, 1
          %s360 = smul.addr %s359, 32
          %s361 = scalar_lea.vmem [#allocation6], %s360
          %s363 = ssub.s32 512, 512
          %364 = vsyncadd %s358, %s363
          %s365 = smul.addr %s33, 4
          %s366 = smul.addr %s32, 32
          %s367 = sadd.s32 %s365, %s366
          %s368 = smul.addr %s367, 128
          %s369 = scalar_lea.hbm %s1, %s368
          %s370 = sshll.u32 %s361, 4
          %s371 = int_to_ptr.vmem [resolvable:$true] %s370
          %376 = dma.hbm_to_vmem [thread:$0]  %s369, 512, %s371, %s358, 256, 256, 16
        $region56: #{tpu_custom_call.1} parent=47 // pred_fallthru
          _
      $region48: #{tpu_custom_call.1} parent=5 // pred_fallthru
        _
      %p377 = scmp.le.s32.totalorder 1, %s25
      %p378 = scmp.lt.s32.totalorder %s25, 17
      %p379 = pnand %p377, %p378
      %p380 = pneg %p379
      // Predicated region
      $region57: #{tpu_custom_call.1} parent=5 // pred_check
        _
      $region58: #{tpu_custom_call.1} parent=5 // pred_check_branch
        %382 = sbr.rel (%p379) target = $region60
      $region59: #{tpu_custom_call.1} parent=5 // pred_region
        %s383 = ssub.s32 %s25, 1
        %s384 = sand.u32 %s52, 1
        %s385 = scalar_lea.sflag [#allocation4], %s384
        %s386 = sand.u32 %s52, 1
        %s387 = smul.addr %s386, 16
        %s388 = scalar_lea.vmem [#allocation3], %s387
        // Predicated region
        $region61: #{tpu_custom_call.1} parent=59 // pred_check
          %p389 = pneg %p65
        $region62: #{tpu_custom_call.1} parent=59 // pred_check_branch
          %391 = sbr.rel (%p389) target = $region64
        $region63: #{tpu_custom_call.1} parent=59 // pred_region
          %392 = dma.done %s385, 256
        $region64: #{tpu_custom_call.1} parent=59 // pred_fallthru
          _
        %s393 = sand.u32 %s80, 1
        %s394 = scalar_lea.sflag [#allocation7], %s393
        %s395 = sand.u32 %s80, 1
        %s396 = smul.addr %s395, 32
        %s397 = scalar_lea.vmem [#allocation6], %s396
        // Predicated region
        $region65: #{tpu_custom_call.1} parent=59 // pred_check
          %p398 = pneg %p93
        $region66: #{tpu_custom_call.1} parent=59 // pred_check_branch
          %400 = sbr.rel (%p398) target = $region68
        $region67: #{tpu_custom_call.1} parent=59 // pred_region
          %401 = dma.done %s394, 512
        $region68: #{tpu_custom_call.1} parent=59 // pred_fallthru
          _
        %s402 = sand.u32 %s52, 1
        %s403 = scalar_lea.sflag [#allocation4], %s402
        %s404 = sand.u32 %s52, 1
        %s405 = smul.addr %s404, 16
        %s406 = scalar_lea.vmem [#allocation3], %s405
        %p407 = pneg %p65
        %p408 = pneg %p62
        %s409 = sand.u32 %s80, 1
        %s410 = scalar_lea.sflag [#allocation7], %s409
        %s411 = sand.u32 %s80, 1
        %s412 = smul.addr %s411, 32
        %s413 = scalar_lea.vmem [#allocation6], %s412
        %p414 = pneg %p93
        %p415 = pneg %p90
        %p416 = pneg %p114
        %p417 = pneg %p111
        %p418 = pneg %p135
        %p419 = pneg %p132
        %p420 = pneg %p156
        %p421 = pneg %p153
        %p422 = pneg %p177
        %p423 = pneg %p174
        %p424 = pneg %p198
        %p425 = pneg %p195
        %p426 = pneg %p219
        %p427 = pneg %p216
        %p428 = pneg %p240
        %p429 = pneg %p237
        %p430 = pneg %p261
        %p431 = pneg %p258
        %p432 = pneg %p289
        %p433 = pneg %p286
        %s434 = sand.u32 %s276, 1
        %s435 = scalar_lea.sflag [#allocation5], %s434
        %s436 = sand.u32 %s276, 1
        %s437 = smul.addr %s436, 16
        %s438 = scalar_lea.vmem [#allocation8], %s437
        %v439 = vld [vmem:[%s2] sm:$0xff]
        %v440 = vld [vmem:[%s2 + $0x8] sm:$0xff]
        %v441 = vld [vmem:[%s3] sm:$0xff]
        %v442 = vld [vmem:[%s3 + $0x8] sm:$0xff]
        %v443 = vld [vmem:[%s6] sm:$0xff]
        %v444 = vld [vmem:[%s6 + $0x8] sm:$0xff]
        %v445 = vld [vmem:[%s7] sm:$0xff]
        %v446 = vld [vmem:[%s7 + $0x8] sm:$0xff]
        %v447 = vld [vmem:[%s5] sm:$0xff]
        %v448 = vld [vmem:[%s5 + $0x8] sm:$0xff]
        %v449 = vld [vmem:[%s9] sm:$0xff]
        %v450 = vld [vmem:[%s9 + $0x8] sm:$0xff]
        %v451 = vld [vmem:[%s8] sm:$0xff]
        %v452 = vld [vmem:[%s8 + $0x8] sm:$0xff]
        %v453 = vld [vmem:[%s4] sm:$0xff]
        %v454 = vld [vmem:[%s4 + $0x8] sm:$0xff]
        %v455 = vld [vmem:[%s397] sm:$0xff]
        %v456 = vld [vmem:[%s397 + $0x8] sm:$0xff]
        %v457 = vld [vmem:[%s397 + $0x10] sm:$0xff]
        %v458 = vld [vmem:[%s397 + $0x18] sm:$0xff]
        %v459 = vld [vmem:[%s388] sm:$0xff]
        %v460 = vld [vmem:[%s388 + $0x8] sm:$0xff]
        %462 = vset.pattern.permute.xlu0 0
        %463 = vperm.xlu0 %462, %v439
        %v464 = vpop.permute.xlu0 %463
        %467 = vset.pattern.permute.xlu0 0
        %468 = vperm.xlu0 %467, %v440
        %v469 = vpop.permute.xlu0 %468
        %v471 = vadd.f32 %v459, %v464
        %v472 = vadd.f32 %v460, %v469
        %474 = vset.pattern.permute.xlu0 0
        %475 = vperm.xlu0 %474, %v441
        %v476 = vpop.permute.xlu0 %475
        %479 = vset.pattern.permute.xlu0 0
        %480 = vperm.xlu0 %479, %v442
        %v481 = vpop.permute.xlu0 %480
        %v483 = vmul.f32 %v476, %v459
        %v484 = vmul.f32 %v481, %v460
        %v485 = vand.u32 2147483647, %v483
        %vm486 = vcmp.le.f32.partialorder %v485, 0.7853982
        %vm487 = vcmp.lt.s32.totalorder %v483, 0
        %v488 = vand.u32 %v483, 2139095040
        %v489 = vshrl.u32 %v488, 23
        %v490 = vsub.s32 %v489, 127
        %v491 = vand.u32 2147483647, %v483
        %v492 = vand.u32 %v491, 8388607
        %v493 = vor.u32 %v492, 8388608
        %v494 = vsub.s32 0, %v493
        %v495 = vadd.s32 %v490, 1
        %vm496 = vcmp.gt.s32.totalorder %v495, 0
        %v497 = vsel %vm496, %v495, 0
        %v498 = vshrl.u32 %v497, 5
        %v499 = vand.u32 %v497, 31
        %v500 = vsub.s32 32, %v499
        %v501 = vshrl.u32 683565275, %v500
        %v502 = vshll.u32 683565275, %v499
        %v503 = vshrl.u32 2475754826, %v500
        %v504 = vor.u32 %v502, %v503
        %v505 = vshll.u32 2475754826, %v499
        %v506 = vshrl.u32 2131351028, %v500
        %v507 = vor.u32 %v505, %v506
        %v508 = vshll.u32 2131351028, %v499
        %v509 = vshrl.u32 2102212464, %v500
        %v510 = vor.u32 %v508, %v509
        %v511 = vshll.u32 2102212464, %v499
        %v512 = vshrl.u32 920167782, %v500
        %v513 = vor.u32 %v511, %v512
        %v514 = vshll.u32 920167782, %v499
        %v515 = vshrl.u32 1326507024, %v500
        %v516 = vor.u32 %v514, %v515
        %vm517 = vcmp.lt.s32.totalorder %v498, 1
        %vm518 = vcmp.lt.s32.totalorder %v498, 2
        %vm519 = vcmp.lt.s32.totalorder %v498, 3
        %vm520 = vcmp.lt.s32.totalorder %v498, 4
        %v521 = vsel %vm517, %v501, %v504
        %v522 = vsel %vm520, %v510, 2102212464
        %v523 = vsel %vm519, %v507, %v522
        %v524 = vsel %vm518, %v521, %v523
        %v525 = vsel %vm517, %v504, %v507
        %v526 = vsel %vm520, %v513, 920167782
        %v527 = vsel %vm519, %v510, %v526
        %v528 = vsel %vm518, %v525, %v527
        %v529 = vsel %vm517, %v507, %v510
        %v530 = vsel %vm520, %v516, 1326507024
        %v531 = vsel %vm519, %v513, %v530
        %v532 = vsel %vm518, %v529, %v531
        %v533 = vshll.u32 %v493, 8
        %v534 = vmul.u32.u64.compose %v533, %v532
        %v535 = vextract.low.u32 %v534
        %v536 = vextract.high.u32 %v534
        %v537 = vmul.u32.u64.compose %v533, %v528
        %v538 = vextract.low.u32 %v537
        %v539 = vextract.high.u32 %v537
        %v540 = vmul.u32 %v533, %v524
        %v541 = vadd.s32 %v536, %v538
        %vm542 = vc.u32 %v536, %v538
        %v543 = vadd.s32 %v539, 1
        %v544 = vsel %vm542, %v543, %v539
        %v545 = vadd.s32 %v540, %v544
        %v546 = vadd.s32 %v545, 536870912
        %v547 = vshrl.u32 %v546, 30
        %v548 = vshll.u32 %v547, 30
        %v549 = vsub.s32 %v545, %v548
        %vm550 = vcmp.lt.s32.totalorder %v549, 0
        %v551 = vsub.s32 0, %v549
        %v552 = vsel %vm550, %v551, %v549
        %v553 = vclz %v552
        %v554 = vsub.s32 %v553, 2
        %vm555 = vcmp.gt.s32.totalorder 0, %v554
        %v556 = vsel %vm555, 0, %v554
        %v557 = vsub.s32 32, %v556
        %v558 = vshll.u32 %v549, %v556
        %v559 = vshrl.u32 %v541, %v557
        %v560 = vor.u32 %v558, %v559
        %v561 = vsub.s32 4294967266, %v556
        %v562 = vadd.s32 %v561, 127
        %v563 = vshll.u32 %v562, 23
        %v564 = vor.u32 4788187, %v563
        %v565 = vand.u32 2147483647, %v564
        %v567 = vcvt.s32.f32 %v560
        %v568 = vmul.f32 %v567, %v565
        %v569 = vxor.u32 %v568, 2147483648
        %v570 = vsel %vm487, %v569, %v568
        %v571 = vsub.s32 4, %v547
        %v572 = vsel %vm487, %v571, %v547
        %v573 = vsel %vm486, %v483, %v570
        %v574 = vsel %vm486, 0, %v572
        %v575 = vcosq.f32.pop %v573
        %v576 = vsinq.f32.pop %v573
        %vm577 = vweird.f32 %v483
        %v578 = vand.u32 %v574, 3
        %vm579 = vcmp.lt.s32.totalorder %v578, 2
        %vm580 = vcmp.eq.s32.totalorder %v578, 0
        %v581 = vxor.u32 %v576, 2147483648
        %v582 = vsel %vm580, %v575, %v581
        %vm583 = vcmp.eq.s32.totalorder %v578, 2
        %v584 = vxor.u32 %v575, 2147483648
        %v585 = vsel %vm583, %v584, %v576
        %v586 = vsel %vm579, %v582, %v585
        %v587 = vsel %vm577, nan, %v586
        %v588 = vand.u32 2147483647, %v484
        %vm589 = vcmp.le.f32.partialorder %v588, 0.7853982
        %vm590 = vcmp.lt.s32.totalorder %v484, 0
        %v591 = vand.u32 %v484, 2139095040
        %v592 = vshrl.u32 %v591, 23
        %v593 = vsub.s32 %v592, 127
        %v594 = vand.u32 2147483647, %v484
        %v595 = vand.u32 %v594, 8388607
        %v596 = vor.u32 %v595, 8388608
        %v597 = vsub.s32 0, %v596
        %v598 = vadd.s32 %v593, 1
        %vm599 = vcmp.gt.s32.totalorder %v598, 0
        %v600 = vsel %vm599, %v598, 0
        %v601 = vshrl.u32 %v600, 5
        %v602 = vand.u32 %v600, 31
        %v603 = vsub.s32 32, %v602
        %v604 = vshrl.u32 683565275, %v603
        %v605 = vshll.u32 683565275, %v602
        %v606 = vshrl.u32 2475754826, %v603
        %v607 = vor.u32 %v605, %v606
        %v608 = vshll.u32 2475754826, %v602
        %v609 = vshrl.u32 2131351028, %v603
        %v610 = vor.u32 %v608, %v609
        %v611 = vshll.u32 2131351028, %v602
        %v612 = vshrl.u32 2102212464, %v603
        %v613 = vor.u32 %v611, %v612
        %v614 = vshll.u32 2102212464, %v602
        %v615 = vshrl.u32 920167782, %v603
        %v616 = vor.u32 %v614, %v615
        %v617 = vshll.u32 920167782, %v602
        %v618 = vshrl.u32 1326507024, %v603
        %v619 = vor.u32 %v617, %v618
        %vm620 = vcmp.lt.s32.totalorder %v601, 1
        %vm621 = vcmp.lt.s32.totalorder %v601, 2
        %vm622 = vcmp.lt.s32.totalorder %v601, 3
        %vm623 = vcmp.lt.s32.totalorder %v601, 4
        %v624 = vsel %vm620, %v604, %v607
        %v625 = vsel %vm623, %v613, 2102212464
        %v626 = vsel %vm622, %v610, %v625
        %v627 = vsel %vm621, %v624, %v626
        %v628 = vsel %vm620, %v607, %v610
        %v629 = vsel %vm623, %v616, 920167782
        %v630 = vsel %vm622, %v613, %v629
        %v631 = vsel %vm621, %v628, %v630
        %v632 = vsel %vm620, %v610, %v613
        %v633 = vsel %vm623, %v619, 1326507024
        %v634 = vsel %vm622, %v616, %v633
        %v635 = vsel %vm621, %v632, %v634
        %v636 = vshll.u32 %v596, 8
        %v637 = vmul.u32.u64.compose %v636, %v635
        %v638 = vextract.low.u32 %v637
        %v639 = vextract.high.u32 %v637
        %v640 = vmul.u32.u64.compose %v636, %v631
        %v641 = vextract.low.u32 %v640
        %v642 = vextract.high.u32 %v640
        %v643 = vmul.u32 %v636, %v627
        %v644 = vadd.s32 %v639, %v641
        %vm645 = vc.u32 %v639, %v641
        %v646 = vadd.s32 %v642, 1
        %v647 = vsel %vm645, %v646, %v642
        %v648 = vadd.s32 %v643, %v647
        %v649 = vadd.s32 %v648, 536870912
        %v650 = vshrl.u32 %v649, 30
        %v651 = vshll.u32 %v650, 30
        %v652 = vsub.s32 %v648, %v651
        %vm653 = vcmp.lt.s32.totalorder %v652, 0
        %v654 = vsub.s32 0, %v652
        %v655 = vsel %vm653, %v654, %v652
        %v656 = vclz %v655
        %v657 = vsub.s32 %v656, 2
        %vm658 = vcmp.gt.s32.totalorder 0, %v657
        %v659 = vsel %vm658, 0, %v657
        %v660 = vsub.s32 32, %v659
        %v661 = vshll.u32 %v652, %v659
        %v662 = vshrl.u32 %v644, %v660
        %v663 = vor.u32 %v661, %v662
        %v664 = vsub.s32 4294967266, %v659
        %v665 = vadd.s32 %v664, 127
        %v666 = vshll.u32 %v665, 23
        %v667 = vor.u32 4788187, %v666
        %v668 = vand.u32 2147483647, %v667
        %v670 = vcvt.s32.f32 %v663
        %v671 = vmul.f32 %v670, %v668
        %v672 = vxor.u32 %v671, 2147483648
        %v673 = vsel %vm590, %v672, %v671
        %v674 = vsub.s32 4, %v650
        %v675 = vsel %vm590, %v674, %v650
        %v676 = vsel %vm589, %v484, %v673
        %v677 = vsel %vm589, 0, %v675
        %v678 = vcosq.f32.pop %v676
        %v679 = vsinq.f32.pop %v676
        %vm680 = vweird.f32 %v484
        %v681 = vand.u32 %v677, 3
        %vm682 = vcmp.lt.s32.totalorder %v681, 2
        %vm683 = vcmp.eq.s32.totalorder %v681, 0
        %v684 = vxor.u32 %v679, 2147483648
        %v685 = vsel %vm683, %v678, %v684
        %vm686 = vcmp.eq.s32.totalorder %v681, 2
        %v687 = vxor.u32 %v678, 2147483648
        %v688 = vsel %vm686, %v687, %v679
        %v689 = vsel %vm682, %v685, %v688
        %v690 = vsel %vm680, nan, %v689
        %v691 = vmul.f32 %v464, %v587
        %v692 = vmul.f32 %v469, %v690
        %v693 = vsub.f32 %v471, %v691
        %v694 = vsub.f32 %v472, %v692
        %695 = vst [vmem:[#allocation2 + $0x8] sm:$0xff] %v693
        %696 = vst [vmem:[#allocation2 + $0x20] sm:$0xff] %v694
        %v697 = vadd.f32 %v455, %v464
        %v698 = vadd.f32 %v457, %v469
        %v699 = vmul.f32 %v476, %v455
        %v700 = vmul.f32 %v481, %v457
        %v701 = vand.u32 2147483647, %v699
        %vm702 = vcmp.le.f32.partialorder %v701, 0.7853982
        %vm703 = vcmp.lt.s32.totalorder %v699, 0
        %v704 = vand.u32 %v699, 2139095040
        %v705 = vshrl.u32 %v704, 23
        %v706 = vsub.s32 %v705, 127
        %v707 = vand.u32 2147483647, %v699
        %v708 = vand.u32 %v707, 8388607
        %v709 = vor.u32 %v708, 8388608
        %v710 = vsub.s32 0, %v709
        %v711 = vadd.s32 %v706, 1
        %vm712 = vcmp.gt.s32.totalorder %v711, 0
        %v713 = vsel %vm712, %v711, 0
        %v714 = vshrl.u32 %v713, 5
        %v715 = vand.u32 %v713, 31
        %v716 = vsub.s32 32, %v715
        %v717 = vshrl.u32 683565275, %v716
        %v718 = vshll.u32 683565275, %v715
        %v719 = vshrl.u32 2475754826, %v716
        %v720 = vor.u32 %v718, %v719
        %v721 = vshll.u32 2475754826, %v715
        %v722 = vshrl.u32 2131351028, %v716
        %v723 = vor.u32 %v721, %v722
        %v724 = vshll.u32 2131351028, %v715
        %v725 = vshrl.u32 2102212464, %v716
        %v726 = vor.u32 %v724, %v725
        %v727 = vshll.u32 2102212464, %v715
        %v728 = vshrl.u32 920167782, %v716
        %v729 = vor.u32 %v727, %v728
        %v730 = vshll.u32 920167782, %v715
        %v731 = vshrl.u32 1326507024, %v716
        %v732 = vor.u32 %v730, %v731
        %vm733 = vcmp.lt.s32.totalorder %v714, 1
        %vm734 = vcmp.lt.s32.totalorder %v714, 2
        %vm735 = vcmp.lt.s32.totalorder %v714, 3
        %vm736 = vcmp.lt.s32.totalorder %v714, 4
        %v737 = vsel %vm733, %v717, %v720
        %v738 = vsel %vm736, %v726, 2102212464
        %v739 = vsel %vm735, %v723, %v738
        %v740 = vsel %vm734, %v737, %v739
        %v741 = vsel %vm733, %v720, %v723
        %v742 = vsel %vm736, %v729, 920167782
        %v743 = vsel %vm735, %v726, %v742
        %v744 = vsel %vm734, %v741, %v743
        %v745 = vsel %vm733, %v723, %v726
        %v746 = vsel %vm736, %v732, 1326507024
        %v747 = vsel %vm735, %v729, %v746
        %v748 = vsel %vm734, %v745, %v747
        %v749 = vshll.u32 %v709, 8
        %v750 = vmul.u32.u64.compose %v749, %v748
        %v751 = vextract.low.u32 %v750
        %v752 = vextract.high.u32 %v750
        %v753 = vmul.u32.u64.compose %v749, %v744
        %v754 = vextract.low.u32 %v753
        %v755 = vextract.high.u32 %v753
        %v756 = vmul.u32 %v749, %v740
        %v757 = vadd.s32 %v752, %v754
        %vm758 = vc.u32 %v752, %v754
        %v759 = vadd.s32 %v755, 1
        %v760 = vsel %vm758, %v759, %v755
        %v761 = vadd.s32 %v756, %v760
        %v762 = vadd.s32 %v761, 536870912
        %v763 = vshrl.u32 %v762, 30
        %v764 = vshll.u32 %v763, 30
        %v765 = vsub.s32 %v761, %v764
        %vm766 = vcmp.lt.s32.totalorder %v765, 0
        %v767 = vsub.s32 0, %v765
        %v768 = vsel %vm766, %v767, %v765
        %v769 = vclz %v768
        %v770 = vsub.s32 %v769, 2
        %vm771 = vcmp.gt.s32.totalorder 0, %v770
        %v772 = vsel %vm771, 0, %v770
        %v773 = vsub.s32 32, %v772
        %v774 = vshll.u32 %v765, %v772
        %v775 = vshrl.u32 %v757, %v773
        %v776 = vor.u32 %v774, %v775
        %v777 = vsub.s32 4294967266, %v772
        %v778 = vadd.s32 %v777, 127
        %v779 = vshll.u32 %v778, 23
        %v780 = vor.u32 4788187, %v779
        %v781 = vand.u32 2147483647, %v780
        %v783 = vcvt.s32.f32 %v776
        %v784 = vmul.f32 %v783, %v781
        %v785 = vxor.u32 %v784, 2147483648
        %v786 = vsel %vm703, %v785, %v784
        %v787 = vsub.s32 4, %v763
        %v788 = vsel %vm703, %v787, %v763
        %v789 = vsel %vm702, %v699, %v786
        %v790 = vsel %vm702, 0, %v788
        %v791 = vcosq.f32.pop %v789
        %v792 = vsinq.f32.pop %v789
        %vm793 = vweird.f32 %v699
        %v794 = vand.u32 %v790, 3
        %vm795 = vcmp.lt.s32.totalorder %v794, 2
        %vm796 = vcmp.eq.s32.totalorder %v794, 0
        %v797 = vxor.u32 %v792, 2147483648
        %v798 = vsel %vm796, %v791, %v797
        %vm799 = vcmp.eq.s32.totalorder %v794, 2
        %v800 = vxor.u32 %v791, 2147483648
        %v801 = vsel %vm799, %v800, %v792
        %v802 = vsel %vm795, %v798, %v801
        %v803 = vsel %vm793, nan, %v802
        %v804 = vand.u32 2147483647, %v700
        %vm805 = vcmp.le.f32.partialorder %v804, 0.7853982
        %vm806 = vcmp.lt.s32.totalorder %v700, 0
        %v807 = vand.u32 %v700, 2139095040
        %v808 = vshrl.u32 %v807, 23
        %v809 = vsub.s32 %v808, 127
        %v810 = vand.u32 2147483647, %v700
        %v811 = vand.u32 %v810, 8388607
        %v812 = vor.u32 %v811, 8388608
        %v813 = vsub.s32 0, %v812
        %v814 = vadd.s32 %v809, 1
        %vm815 = vcmp.gt.s32.totalorder %v814, 0
        %v816 = vsel %vm815, %v814, 0
        %v817 = vshrl.u32 %v816, 5
        %v818 = vand.u32 %v816, 31
        %v819 = vsub.s32 32, %v818
        %v820 = vshrl.u32 683565275, %v819
        %v821 = vshll.u32 683565275, %v818
        %v822 = vshrl.u32 2475754826, %v819
        %v823 = vor.u32 %v821, %v822
        %v824 = vshll.u32 2475754826, %v818
        %v825 = vshrl.u32 2131351028, %v819
        %v826 = vor.u32 %v824, %v825
        %v827 = vshll.u32 2131351028, %v818
        %v828 = vshrl.u32 2102212464, %v819
        %v829 = vor.u32 %v827, %v828
        %v830 = vshll.u32 2102212464, %v818
        %v831 = vshrl.u32 920167782, %v819
        %v832 = vor.u32 %v830, %v831
        %v833 = vshll.u32 920167782, %v818
        %v834 = vshrl.u32 1326507024, %v819
        %v835 = vor.u32 %v833, %v834
        %vm836 = vcmp.lt.s32.totalorder %v817, 1
        %vm837 = vcmp.lt.s32.totalorder %v817, 2
        %vm838 = vcmp.lt.s32.totalorder %v817, 3
        %vm839 = vcmp.lt.s32.totalorder %v817, 4
        %v840 = vsel %vm836, %v820, %v823
        %v841 = vsel %vm839, %v829, 2102212464
        %v842 = vsel %vm838, %v826, %v841
        %v843 = vsel %vm837, %v840, %v842
        %v844 = vsel %vm836, %v823, %v826
        %v845 = vsel %vm839, %v832, 920167782
        %v846 = vsel %vm838, %v829, %v845
        %v847 = vsel %vm837, %v844, %v846
        %v848 = vsel %vm836, %v826, %v829
        %v849 = vsel %vm839, %v835, 1326507024
        %v850 = vsel %vm838, %v832, %v849
        %v851 = vsel %vm837, %v848, %v850
        %v852 = vshll.u32 %v812, 8
        %v853 = vmul.u32.u64.compose %v852, %v851
        %v854 = vextract.low.u32 %v853
        %v855 = vextract.high.u32 %v853
        %v856 = vmul.u32.u64.compose %v852, %v847
        %v857 = vextract.low.u32 %v856
        %v858 = vextract.high.u32 %v856
        %v859 = vmul.u32 %v852, %v843
        %v860 = vadd.s32 %v855, %v857
        %vm861 = vc.u32 %v855, %v857
        %v862 = vadd.s32 %v858, 1
        %v863 = vsel %vm861, %v862, %v858
        %v864 = vadd.s32 %v859, %v863
        %v865 = vadd.s32 %v864, 536870912
        %v866 = vshrl.u32 %v865, 30
        %v867 = vshll.u32 %v866, 30
        %v868 = vsub.s32 %v864, %v867
        %vm869 = vcmp.lt.s32.totalorder %v868, 0
        %v870 = vsub.s32 0, %v868
        %v871 = vsel %vm869, %v870, %v868
        %v872 = vclz %v871
        %v873 = vsub.s32 %v872, 2
        %vm874 = vcmp.gt.s32.totalorder 0, %v873
        %v875 = vsel %vm874, 0, %v873
        %v876 = vsub.s32 32, %v875
        %v877 = vshll.u32 %v868, %v875
        %v878 = vshrl.u32 %v860, %v876
        %v879 = vor.u32 %v877, %v878
        %v880 = vsub.s32 4294967266, %v875
        %v881 = vadd.s32 %v880, 127
        %v882 = vshll.u32 %v881, 23
        %v883 = vor.u32 4788187, %v882
        %v884 = vand.u32 2147483647, %v883
        %v886 = vcvt.s32.f32 %v879
        %v887 = vmul.f32 %v886, %v884
        %v888 = vxor.u32 %v887, 2147483648
        %v889 = vsel %vm806, %v888, %v887
        %v890 = vsub.s32 4, %v866
        %v891 = vsel %vm806, %v890, %v866
        %v892 = vsel %vm805, %v700, %v889
        %v893 = vsel %vm805, 0, %v891
        %v894 = vcosq.f32.pop %v892
        %v895 = vsinq.f32.pop %v892
        %vm896 = vweird.f32 %v700
        %v897 = vand.u32 %v893, 3
        %vm898 = vcmp.lt.s32.totalorder %v897, 2
        %vm899 = vcmp.eq.s32.totalorder %v897, 0
        %v900 = vxor.u32 %v895, 2147483648
        %v901 = vsel %vm899, %v894, %v900
        %vm902 = vcmp.eq.s32.totalorder %v897, 2
        %v903 = vxor.u32 %v894, 2147483648
        %v904 = vsel %vm902, %v903, %v895
        %v905 = vsel %vm898, %v901, %v904
        %v906 = vsel %vm896, nan, %v905
        %v907 = vmul.f32 %v464, %v803
        %v908 = vmul.f32 %v469, %v906
        %v909 = vsub.f32 %v697, %v907
        %v910 = vsub.f32 %v698, %v908
        %911 = vst [vmem:[#allocation2] sm:$0xff] %v909
        %912 = vst [vmem:[#allocation2 + $0x18] sm:$0xff] %v910
        %v913 = vadd.f32 %v456, %v464
        %v914 = vadd.f32 %v458, %v469
        %v915 = vmul.f32 %v476, %v456
        %v916 = vmul.f32 %v481, %v458
        %v917 = vand.u32 2147483647, %v915
        %vm918 = vcmp.le.f32.partialorder %v917, 0.7853982
        %vm919 = vcmp.lt.s32.totalorder %v915, 0
        %v920 = vand.u32 %v915, 2139095040
        %v921 = vshrl.u32 %v920, 23
        %v922 = vsub.s32 %v921, 127
        %v923 = vand.u32 2147483647, %v915
        %v924 = vand.u32 %v923, 8388607
        %v925 = vor.u32 %v924, 8388608
        %v926 = vsub.s32 0, %v925
        %v927 = vadd.s32 %v922, 1
        %vm928 = vcmp.gt.s32.totalorder %v927, 0
        %v929 = vsel %vm928, %v927, 0
        %v930 = vshrl.u32 %v929, 5
        %v931 = vand.u32 %v929, 31
        %v932 = vsub.s32 32, %v931
        %v933 = vshrl.u32 683565275, %v932
        %v934 = vshll.u32 683565275, %v931
        %v935 = vshrl.u32 2475754826, %v932
        %v936 = vor.u32 %v934, %v935
        %v937 = vshll.u32 2475754826, %v931
        %v938 = vshrl.u32 2131351028, %v932
        %v939 = vor.u32 %v937, %v938
        %v940 = vshll.u32 2131351028, %v931
        %v941 = vshrl.u32 2102212464, %v932
        %v942 = vor.u32 %v940, %v941
        %v943 = vshll.u32 2102212464, %v931
        %v944 = vshrl.u32 920167782, %v932
        %v945 = vor.u32 %v943, %v944
        %v946 = vshll.u32 920167782, %v931
        %v947 = vshrl.u32 1326507024, %v932
        %v948 = vor.u32 %v946, %v947
        %vm949 = vcmp.lt.s32.totalorder %v930, 1
        %vm950 = vcmp.lt.s32.totalorder %v930, 2
        %vm951 = vcmp.lt.s32.totalorder %v930, 3
        %vm952 = vcmp.lt.s32.totalorder %v930, 4
        %v953 = vsel %vm949, %v933, %v936
        %v954 = vsel %vm952, %v942, 2102212464
        %v955 = vsel %vm951, %v939, %v954
        %v956 = vsel %vm950, %v953, %v955
        %v957 = vsel %vm949, %v936, %v939
        %v958 = vsel %vm952, %v945, 920167782
        %v959 = vsel %vm951, %v942, %v958
        %v960 = vsel %vm950, %v957, %v959
        %v961 = vsel %vm949, %v939, %v942
        %v962 = vsel %vm952, %v948, 1326507024
        %v963 = vsel %vm951, %v945, %v962
        %v964 = vsel %vm950, %v961, %v963
        %v965 = vshll.u32 %v925, 8
        %v966 = vmul.u32.u64.compose %v965, %v964
        %v967 = vextract.low.u32 %v966
        %v968 = vextract.high.u32 %v966
        %v969 = vmul.u32.u64.compose %v965, %v960
        %v970 = vextract.low.u32 %v969
        %v971 = vextract.high.u32 %v969
        %v972 = vmul.u32 %v965, %v956
        %v973 = vadd.s32 %v968, %v970
        %vm974 = vc.u32 %v968, %v970
        %v975 = vadd.s32 %v971, 1
        %v976 = vsel %vm974, %v975, %v971
        %v977 = vadd.s32 %v972, %v976
        %v978 = vadd.s32 %v977, 536870912
        %v979 = vshrl.u32 %v978, 30
        %v980 = vshll.u32 %v979, 30
        %v981 = vsub.s32 %v977, %v980
        %vm982 = vcmp.lt.s32.totalorder %v981, 0
        %v983 = vsub.s32 0, %v981
        %v984 = vsel %vm982, %v983, %v981
        %v985 = vclz %v984
        %v986 = vsub.s32 %v985, 2
        %vm987 = vcmp.gt.s32.totalorder 0, %v986
        %v988 = vsel %vm987, 0, %v986
        %v989 = vsub.s32 32, %v988
        %v990 = vshll.u32 %v981, %v988
        %v991 = vshrl.u32 %v973, %v989
        %v992 = vor.u32 %v990, %v991
        %v993 = vsub.s32 4294967266, %v988
        %v994 = vadd.s32 %v993, 127
        %v995 = vshll.u32 %v994, 23
        %v996 = vor.u32 4788187, %v995
        %v997 = vand.u32 2147483647, %v996
        %v999 = vcvt.s32.f32 %v992
        %v1000 = vmul.f32 %v999, %v997
        %v1001 = vxor.u32 %v1000, 2147483648
        %v1002 = vsel %vm919, %v1001, %v1000
        %v1003 = vsub.s32 4, %v979
        %v1004 = vsel %vm919, %v1003, %v979
        %v1005 = vsel %vm918, %v915, %v1002
        %v1006 = vsel %vm918, 0, %v1004
        %v1007 = vcosq.f32.pop %v1005
        %v1008 = vsinq.f32.pop %v1005
        %vm1009 = vweird.f32 %v915
        %v1010 = vand.u32 %v1006, 3
        %vm1011 = vcmp.lt.s32.totalorder %v1010, 2
        %vm1012 = vcmp.eq.s32.totalorder %v1010, 0
        %v1013 = vxor.u32 %v1008, 2147483648
        %v1014 = vsel %vm1012, %v1007, %v1013
        %vm1015 = vcmp.eq.s32.totalorder %v1010, 2
        %v1016 = vxor.u32 %v1007, 2147483648
        %v1017 = vsel %vm1015, %v1016, %v1008
        %v1018 = vsel %vm1011, %v1014, %v1017
        %v1019 = vsel %vm1009, nan, %v1018
        %v1020 = vand.u32 2147483647, %v916
        %vm1021 = vcmp.le.f32.partialorder %v1020, 0.7853982
        %vm1022 = vcmp.lt.s32.totalorder %v916, 0
        %v1023 = vand.u32 %v916, 2139095040
        %v1024 = vshrl.u32 %v1023, 23
        %v1025 = vsub.s32 %v1024, 127
        %v1026 = vand.u32 2147483647, %v916
        %v1027 = vand.u32 %v1026, 8388607
        %v1028 = vor.u32 %v1027, 8388608
        %v1029 = vsub.s32 0, %v1028
        %v1030 = vadd.s32 %v1025, 1
        %vm1031 = vcmp.gt.s32.totalorder %v1030, 0
        %v1032 = vsel %vm1031, %v1030, 0
        %v1033 = vshrl.u32 %v1032, 5
        %v1034 = vand.u32 %v1032, 31
        %v1035 = vsub.s32 32, %v1034
        %v1036 = vshrl.u32 683565275, %v1035
        %v1037 = vshll.u32 683565275, %v1034
        %v1038 = vshrl.u32 2475754826, %v1035
        %v1039 = vor.u32 %v1037, %v1038
        %v1040 = vshll.u32 2475754826, %v1034
        %v1041 = vshrl.u32 2131351028, %v1035
        %v1042 = vor.u32 %v1040, %v1041
        %v1043 = vshll.u32 2131351028, %v1034
        %v1044 = vshrl.u32 2102212464, %v1035
        %v1045 = vor.u32 %v1043, %v1044
        %v1046 = vshll.u32 2102212464, %v1034
        %v1047 = vshrl.u32 920167782, %v1035
        %v1048 = vor.u32 %v1046, %v1047
        %v1049 = vshll.u32 920167782, %v1034
        %v1050 = vshrl.u32 1326507024, %v1035
        %v1051 = vor.u32 %v1049, %v1050
        %vm1052 = vcmp.lt.s32.totalorder %v1033, 1
        %vm1053 = vcmp.lt.s32.totalorder %v1033, 2
        %vm1054 = vcmp.lt.s32.totalorder %v1033, 3
        %vm1055 = vcmp.lt.s32.totalorder %v1033, 4
        %v1056 = vsel %vm1052, %v1036, %v1039
        %v1057 = vsel %vm1055, %v1045, 2102212464
        %v1058 = vsel %vm1054, %v1042, %v1057
        %v1059 = vsel %vm1053, %v1056, %v1058
        %v1060 = vsel %vm1052, %v1039, %v1042
        %v1061 = vsel %vm1055, %v1048, 920167782
        %v1062 = vsel %vm1054, %v1045, %v1061
        %v1063 = vsel %vm1053, %v1060, %v1062
        %v1064 = vsel %vm1052, %v1042, %v1045
        %v1065 = vsel %vm1055, %v1051, 1326507024
        %v1066 = vsel %vm1054, %v1048, %v1065
        %v1067 = vsel %vm1053, %v1064, %v1066
        %v1068 = vshll.u32 %v1028, 8
        %v1069 = vmul.u32.u64.compose %v1068, %v1067
        %v1070 = vextract.low.u32 %v1069
        %v1071 = vextract.high.u32 %v1069
        %v1072 = vmul.u32.u64.compose %v1068, %v1063
        %v1073 = vextract.low.u32 %v1072
        %v1074 = vextract.high.u32 %v1072
        %v1075 = vmul.u32 %v1068, %v1059
        %v1076 = vadd.s32 %v1071, %v1073
        %vm1077 = vc.u32 %v1071, %v1073
        %v1078 = vadd.s32 %v1074, 1
        %v1079 = vsel %vm1077, %v1078, %v1074
        %v1080 = vadd.s32 %v1075, %v1079
        %v1081 = vadd.s32 %v1080, 536870912
        %v1082 = vshrl.u32 %v1081, 30
        %v1083 = vshll.u32 %v1082, 30
        %v1084 = vsub.s32 %v1080, %v1083
        %vm1085 = vcmp.lt.s32.totalorder %v1084, 0
        %v1086 = vsub.s32 0, %v1084
        %v1087 = vsel %vm1085, %v1086, %v1084
        %v1088 = vclz %v1087
        %v1089 = vsub.s32 %v1088, 2
        %vm1090 = vcmp.gt.s32.totalorder 0, %v1089
        %v1091 = vsel %vm1090, 0, %v1089
        %v1092 = vsub.s32 32, %v1091
        %v1093 = vshll.u32 %v1084, %v1091
        %v1094 = vshrl.u32 %v1076, %v1092
        %v1095 = vor.u32 %v1093, %v1094
        %v1096 = vsub.s32 4294967266, %v1091
        %v1097 = vadd.s32 %v1096, 127
        %v1098 = vshll.u32 %v1097, 23
        %v1099 = vor.u32 4788187, %v1098
        %v1100 = vand.u32 2147483647, %v1099
        %v1102 = vcvt.s32.f32 %v1095
        %v1103 = vmul.f32 %v1102, %v1100
        %v1104 = vxor.u32 %v1103, 2147483648
        %v1105 = vsel %vm1022, %v1104, %v1103
        %v1106 = vsub.s32 4, %v1082
        %v1107 = vsel %vm1022, %v1106, %v1082
        %v1108 = vsel %vm1021, %v916, %v1105
        %v1109 = vsel %vm1021, 0, %v1107
        %v1110 = vcosq.f32.pop %v1108
        %v1111 = vsinq.f32.pop %v1108
        %vm1112 = vweird.f32 %v916
        %v1113 = vand.u32 %v1109, 3
        %vm1114 = vcmp.lt.s32.totalorder %v1113, 2
        %vm1115 = vcmp.eq.s32.totalorder %v1113, 0
        %v1116 = vxor.u32 %v1111, 2147483648
        %v1117 = vsel %vm1115, %v1110, %v1116
        %vm1118 = vcmp.eq.s32.totalorder %v1113, 2
        %v1119 = vxor.u32 %v1110, 2147483648
        %v1120 = vsel %vm1118, %v1119, %v1111
        %v1121 = vsel %vm1114, %v1117, %v1120
        %v1122 = vsel %vm1112, nan, %v1121
        %v1123 = vmul.f32 %v464, %v1019
        %v1124 = vmul.f32 %v469, %v1122
        %v1125 = vsub.f32 %v913, %v1123
        %v1126 = vsub.f32 %v914, %v1124
        %1127 = vst [vmem:[#allocation2 + $0x10] sm:$0xff] %v1125
        %1128 = vst [vmem:[#allocation2 + $0x28] sm:$0xff] %v1126
        %v1129 = vld [vmem:[#allocation2] sm:$0xff]
        %v1130 = vld [vmem:[#allocation2 + $0x8] sm:$0xff]
        %v1131 = vld [vmem:[#allocation2 + $0x18] sm:$0xff]
        %v1132 = vld [vmem:[#allocation2 + $0x20] sm:$0xff]
        %1135 = vrot.lane.b32.xlu0 %v453, 112
        %v1136 = vpop.permute.xlu0 %1135
        %1137 = vrot.lane.b32.xlu0 %v454, 112
        %v1138 = vpop.permute.xlu0 %1137
        %1143 = vrot.lane.b32.xlu0 %v1129, 2
        %v1144 = vpop.permute.xlu0 %1143
        %1145 = vrot.lane.b32.xlu0 %v1130, 2
        %v1146 = vpop.permute.xlu0 %1145
        %1147 = vrot.lane.b32.xlu0 %v1131, 2
        %v1148 = vpop.permute.xlu0 %1147
        %1149 = vrot.lane.b32.xlu0 %v1132, 2
        %v1150 = vpop.permute.xlu0 %1149
        %vm1151 = vcmask 15360
        %v1152 = vsel %vm1151, %v1144, %v1146
        %v1153 = vsel %vm1151, %v1148, %v1150
        %vm1156 = vcmask 130048
        %v1157 = vsel %vm1156, %v1136, 0
        %v1159 = vsel %vm1156, %v1138, 0
        %1161 = vmatprep.subr.mxu0 0.0
        %1162 = vmatpush1.msra.mxu0 0.0
        %1163 = vmatprep.subr.mxu0 0.0
        %1164 = vmatpush1.msra.mxu0 0.0
        %1165 = vmatprep.subr.mxu0 0.0
        %1166 = vmatpush1.msra.mxu0 0.0
        %1167 = vmatprep.subr.mxu0 0.0
        %1168 = vmatpush1.msra.mxu0 0.0
        %1169 = vmatprep.subr.mxu0 0.0
        %1170 = vmatpush1.msra.mxu0 0.0
        %1171 = vmatprep.subr.mxu0 0.0
        %1172 = vmatpush1.msra.mxu0 0.0
        %1173 = vmatprep.subr.mxu0 0.0
        %1174 = vmatpush1.msra.mxu0 0.0
        %1175 = vmatprep.subr.mxu0 0.0
        %1176 = vmatpush1.msra.mxu0 0.0
        %1177 = vmatprep.subr.mxu0 0.0
        %1178 = vmatpush1.msra.mxu0 0.0
        %1179 = vmatprep.subr.mxu0 0.0
        %1180 = vmatpush1.msra.mxu0 0.0
        %1181 = vmatprep.subr.mxu0 0.0
        %1182 = vmatpush1.msra.mxu0 0.0
        %1183 = vmatprep.subr.mxu0 0.0
        %1184 = vmatpush1.msra.mxu0 0.0
        %1185 = vmatprep.subr.mxu0 0.0
        %1186 = vmatpush1.msra.mxu0 0.0
        %1187 = vmatprep.subr.mxu0 0.0
        %1188 = vmatpush1.msra.mxu0 0.0
        %1189 = vmatprep.subr.mxu0 0.0
        %1190 = vmatpush1.msra.mxu0 %v1153
        %1191 = vmatprep.subr.mxu0 0.0
        %1192 = vmatpush1.msra.mxu0 %v1152
        %1193 = vmatprep.subr.mxu0 0.0
        %1194 = vmatpush2.msra.mxu0 0.0
        %1195 = vmatprep.subr.mxu0 0.0
        %1196 = vmatpush2.msra.mxu0 0.0
        %1197 = vmatprep.subr.mxu0 0.0
        %1198 = vmatpush2.msra.mxu0 0.0
        %1199 = vmatprep.subr.mxu0 0.0
        %1200 = vmatpush2.msra.mxu0 0.0
        %1201 = vmatprep.subr.mxu0 0.0
        %1202 = vmatpush2.msra.mxu0 0.0
        %1203 = vmatprep.subr.mxu0 0.0
        %1204 = vmatpush2.msra.mxu0 0.0
        %1205 = vmatprep.subr.mxu0 0.0
        %1206 = vmatpush2.msra.mxu0 0.0
        %1207 = vmatprep.subr.mxu0 0.0
        %1208 = vmatpush2.msra.mxu0 0.0
        %1209 = vmatprep.subr.mxu0 0.0
        %1210 = vmatpush2.msra.mxu0 0.0
        %1211 = vmatprep.subr.mxu0 0.0
        %1212 = vmatpush2.msra.mxu0 0.0
        %1213 = vmatprep.subr.mxu0 0.0
        %1214 = vmatpush2.msra.mxu0 0.0
        %1215 = vmatprep.subr.mxu0 0.0
        %1216 = vmatpush2.msra.mxu0 0.0
        %1217 = vmatprep.subr.mxu0 0.0
        %1218 = vmatpush2.msra.mxu0 0.0
        %1219 = vmatprep.subr.mxu0 0.0
        %1220 = vmatpush2.msra.mxu0 0.0
        %1221 = vmatprep.subr.mxu0 0.0
        %1222 = vmatpush2.msra.mxu0 0.0
        %1223 = vmatprep.subr.mxu0 0.0
        %1224 = vmatpush2.msra.mxu0 0.0
        %1225 = vmatprep.mubr.f32.mxu0 0.0
        %1226 = vmatmul.mubr.f32.gmra.mxu0 %v1157
        %v1227 = vpop.f32.mrf.mxu0
        %v1228 = vadd.f32 0.0, %v1227
        %v1229 = vpop.f32.mrf.mxu0
        %1230 = vmatprep.mubr.f32.mxu0 0.0
        %1231 = vmatmul.mubr.f32.gmra.mxu0 %v1159
        %v1232 = vpop.f32.mrf.mxu0
        %v1233 = vadd.f32 0.0, %v1232
        %v1234 = vpop.f32.mrf.mxu0
        %1235 = vdwg.mxu0
        %1236 = vrot.lane.b32.xlu0 %v1129, 3
        %v1237 = vpop.permute.xlu0 %1236
        %1238 = vrot.lane.b32.xlu0 %v1130, 3
        %v1239 = vpop.permute.xlu0 %1238
        %1240 = vrot.lane.b32.xlu0 %v1131, 3
        %v1241 = vpop.permute.xlu0 %1240
        %1242 = vrot.lane.b32.xlu0 %v1132, 3
        %v1243 = vpop.permute.xlu0 %1242
        %vm1244 = vcmask 23552
        %v1245 = vsel %vm1244, %v1237, %v1239
        %v1246 = vsel %vm1244, %v1241, %v1243
        %v1249 = vsel %vm1156, %v453, 0
        %v1251 = vsel %vm1156, %v454, 0
        %1253 = vmatprep.subr.mxu0 0.0
        %1254 = vmatpush1.msra.mxu0 0.0
        %1255 = vmatprep.subr.mxu0 0.0
        %1256 = vmatpush1.msra.mxu0 0.0
        %1257 = vmatprep.subr.mxu0 0.0
        %1258 = vmatpush1.msra.mxu0 0.0
        %1259 = vmatprep.subr.mxu0 0.0
        %1260 = vmatpush1.msra.mxu0 0.0
        %1261 = vmatprep.subr.mxu0 0.0
        %1262 = vmatpush1.msra.mxu0 0.0
        %1263 = vmatprep.subr.mxu0 0.0
        %1264 = vmatpush1.msra.mxu0 0.0
        %1265 = vmatprep.subr.mxu0 0.0
        %1266 = vmatpush1.msra.mxu0 0.0
        %1267 = vmatprep.subr.mxu0 0.0
        %1268 = vmatpush1.msra.mxu0 0.0
        %1269 = vmatprep.subr.mxu0 0.0
        %1270 = vmatpush1.msra.mxu0 0.0
        %1271 = vmatprep.subr.mxu0 0.0
        %1272 = vmatpush1.msra.mxu0 0.0
        %1273 = vmatprep.subr.mxu0 0.0
        %1274 = vmatpush1.msra.mxu0 0.0
        %1275 = vmatprep.subr.mxu0 0.0
        %1276 = vmatpush1.msra.mxu0 0.0
        %1277 = vmatprep.subr.mxu0 0.0
        %1278 = vmatpush1.msra.mxu0 0.0
        %1279 = vmatprep.subr.mxu0 0.0
        %1280 = vmatpush1.msra.mxu0 0.0
        %1281 = vmatprep.subr.mxu0 0.0
        %1282 = vmatpush1.msra.mxu0 %v1246
        %1283 = vmatprep.subr.mxu0 0.0
        %1284 = vmatpush1.msra.mxu0 %v1245
        %1285 = vmatprep.subr.mxu0 0.0
        %1286 = vmatpush2.msra.mxu0 0.0
        %1287 = vmatprep.subr.mxu0 0.0
        %1288 = vmatpush2.msra.mxu0 0.0
        %1289 = vmatprep.subr.mxu0 0.0
        %1290 = vmatpush2.msra.mxu0 0.0
        %1291 = vmatprep.subr.mxu0 0.0
        %1292 = vmatpush2.msra.mxu0 0.0
        %1293 = vmatprep.subr.mxu0 0.0
        %1294 = vmatpush2.msra.mxu0 0.0
        %1295 = vmatprep.subr.mxu0 0.0
        %1296 = vmatpush2.msra.mxu0 0.0
        %1297 = vmatprep.subr.mxu0 0.0
        %1298 = vmatpush2.msra.mxu0 0.0
        %1299 = vmatprep.subr.mxu0 0.0
        %1300 = vmatpush2.msra.mxu0 0.0
        %1301 = vmatprep.subr.mxu0 0.0
        %1302 = vmatpush2.msra.mxu0 0.0
        %1303 = vmatprep.subr.mxu0 0.0
        %1304 = vmatpush2.msra.mxu0 0.0
        %1305 = vmatprep.subr.mxu0 0.0
        %1306 = vmatpush2.msra.mxu0 0.0
        %1307 = vmatprep.subr.mxu0 0.0
        %1308 = vmatpush2.msra.mxu0 0.0
        %1309 = vmatprep.subr.mxu0 0.0
        %1310 = vmatpush2.msra.mxu0 0.0
        %1311 = vmatprep.subr.mxu0 0.0
        %1312 = vmatpush2.msra.mxu0 0.0
        %1313 = vmatprep.subr.mxu0 0.0
        %1314 = vmatpush2.msra.mxu0 0.0
        %1315 = vmatprep.subr.mxu0 0.0
        %1316 = vmatpush2.msra.mxu0 0.0
        %1317 = vmatprep.mubr.f32.mxu0 0.0
        %1318 = vmatmul.mubr.f32.gmra.mxu0 %v1249
        %v1319 = vpop.f32.mrf.mxu0
        %v1320 = vadd.f32 %v1228, %v1319
        %v1321 = vpop.f32.mrf.mxu0
        %1322 = vmatprep.mubr.f32.mxu0 0.0
        %1323 = vmatmul.mubr.f32.gmra.mxu0 %v1251
        %v1324 = vpop.f32.mrf.mxu0
        %v1325 = vadd.f32 %v1233, %v1324
        %v1326 = vpop.f32.mrf.mxu0
        %1327 = vdwg.mxu0
        %1328 = vrot.lane.b32.xlu0 %v453, 96
        %v1329 = vpop.permute.xlu0 %1328
        %1330 = vrot.lane.b32.xlu0 %v454, 96
        %v1331 = vpop.permute.xlu0 %1330
        %1332 = vrot.lane.b32.xlu0 %v1129, 1
        %v1333 = vpop.permute.xlu0 %1332
        %1334 = vrot.lane.b32.xlu0 %v1130, 1
        %v1335 = vpop.permute.xlu0 %1334
        %1336 = vrot.lane.b32.xlu0 %v1131, 1
        %v1337 = vpop.permute.xlu0 %1336
        %1338 = vrot.lane.b32.xlu0 %v1132, 1
        %v1339 = vpop.permute.xlu0 %1338
        %vm1340 = vcmask 7168
        %v1341 = vsel %vm1340, %v1333, %v1335
        %v1342 = vsel %vm1340, %v1337, %v1339
        %v1345 = vsel %vm1156, %v1329, 0
        %v1347 = vsel %vm1156, %v1331, 0
        %1349 = vmatprep.subr.mxu0 0.0
        %1350 = vmatpush1.msra.mxu0 0.0
        %1351 = vmatprep.subr.mxu0 0.0
        %1352 = vmatpush1.msra.mxu0 0.0
        %1353 = vmatprep.subr.mxu0 0.0
        %1354 = vmatpush1.msra.mxu0 0.0
        %1355 = vmatprep.subr.mxu0 0.0
        %1356 = vmatpush1.msra.mxu0 0.0
        %1357 = vmatprep.subr.mxu0 0.0
        %1358 = vmatpush1.msra.mxu0 0.0
        %1359 = vmatprep.subr.mxu0 0.0
        %1360 = vmatpush1.msra.mxu0 0.0
        %1361 = vmatprep.subr.mxu0 0.0
        %1362 = vmatpush1.msra.mxu0 0.0
        %1363 = vmatprep.subr.mxu0 0.0
        %1364 = vmatpush1.msra.mxu0 0.0
        %1365 = vmatprep.subr.mxu0 0.0
        %1366 = vmatpush1.msra.mxu0 0.0
        %1367 = vmatprep.subr.mxu0 0.0
        %1368 = vmatpush1.msra.mxu0 0.0
        %1369 = vmatprep.subr.mxu0 0.0
        %1370 = vmatpush1.msra.mxu0 0.0
        %1371 = vmatprep.subr.mxu0 0.0
        %1372 = vmatpush1.msra.mxu0 0.0
        %1373 = vmatprep.subr.mxu0 0.0
        %1374 = vmatpush1.msra.mxu0 0.0
        %1375 = vmatprep.subr.mxu0 0.0
        %1376 = vmatpush1.msra.mxu0 0.0
        %1377 = vmatprep.subr.mxu0 0.0
        %1378 = vmatpush1.msra.mxu0 %v1342
        %1379 = vmatprep.subr.mxu0 0.0
        %1380 = vmatpush1.msra.mxu0 %v1341
        %1381 = vmatprep.subr.mxu0 0.0
        %1382 = vmatpush2.msra.mxu0 0.0
        %1383 = vmatprep.subr.mxu0 0.0
        %1384 = vmatpush2.msra.mxu0 0.0
        %1385 = vmatprep.subr.mxu0 0.0
        %1386 = vmatpush2.msra.mxu0 0.0
        %1387 = vmatprep.subr.mxu0 0.0
        %1388 = vmatpush2.msra.mxu0 0.0
        %1389 = vmatprep.subr.mxu0 0.0
        %1390 = vmatpush2.msra.mxu0 0.0
        %1391 = vmatprep.subr.mxu0 0.0
        %1392 = vmatpush2.msra.mxu0 0.0
        %1393 = vmatprep.subr.mxu0 0.0
        %1394 = vmatpush2.msra.mxu0 0.0
        %1395 = vmatprep.subr.mxu0 0.0
        %1396 = vmatpush2.msra.mxu0 0.0
        %1397 = vmatprep.subr.mxu0 0.0
        %1398 = vmatpush2.msra.mxu0 0.0
        %1399 = vmatprep.subr.mxu0 0.0
        %1400 = vmatpush2.msra.mxu0 0.0
        %1401 = vmatprep.subr.mxu0 0.0
        %1402 = vmatpush2.msra.mxu0 0.0
        %1403 = vmatprep.subr.mxu0 0.0
        %1404 = vmatpush2.msra.mxu0 0.0
        %1405 = vmatprep.subr.mxu0 0.0
        %1406 = vmatpush2.msra.mxu0 0.0
        %1407 = vmatprep.subr.mxu0 0.0
        %1408 = vmatpush2.msra.mxu0 0.0
        %1409 = vmatprep.subr.mxu0 0.0
        %1410 = vmatpush2.msra.mxu0 0.0
        %1411 = vmatprep.subr.mxu0 0.0
        %1412 = vmatpush2.msra.mxu0 0.0
        %1413 = vmatprep.mubr.f32.mxu0 0.0
        %1414 = vmatmul.mubr.f32.gmra.mxu0 %v1345
        %v1415 = vpop.f32.mrf.mxu0
        %v1416 = vadd.f32 0.0, %v1415
        %v1417 = vpop.f32.mrf.mxu0
        %1418 = vmatprep.mubr.f32.mxu0 0.0
        %1419 = vmatmul.mubr.f32.gmra.mxu0 %v1347
        %v1420 = vpop.f32.mrf.mxu0
        %v1421 = vadd.f32 0.0, %v1420
        %v1422 = vpop.f32.mrf.mxu0
        %1423 = vdwg.mxu0
        %v1424 = vadd.f32 %v1320, %v1416
        %v1425 = vadd.f32 %v1325, %v1421
        %1426 = vrot.lane.b32.xlu0 %v453, 80
        %v1427 = vpop.permute.xlu0 %1426
        %1428 = vrot.lane.b32.xlu0 %v454, 80
        %v1429 = vpop.permute.xlu0 %1428
        %v1430 = vsel %vm1156, %v1427, 0
        %v1432 = vsel %vm1156, %v1429, 0
        %1434 = vmatprep.subr.mxu0 0.0
        %1435 = vmatpush1.msra.mxu0 0.0
        %1436 = vmatprep.subr.mxu0 0.0
        %1437 = vmatpush1.msra.mxu0 0.0
        %1438 = vmatprep.subr.mxu0 0.0
        %1439 = vmatpush1.msra.mxu0 0.0
        %1440 = vmatprep.subr.mxu0 0.0
        %1441 = vmatpush1.msra.mxu0 0.0
        %1442 = vmatprep.subr.mxu0 0.0
        %1443 = vmatpush1.msra.mxu0 0.0
        %1444 = vmatprep.subr.mxu0 0.0
        %1445 = vmatpush1.msra.mxu0 0.0
        %1446 = vmatprep.subr.mxu0 0.0
        %1447 = vmatpush1.msra.mxu0 0.0
        %1448 = vmatprep.subr.mxu0 0.0
        %1449 = vmatpush1.msra.mxu0 0.0
        %1450 = vmatprep.subr.mxu0 0.0
        %1451 = vmatpush1.msra.mxu0 0.0
        %1452 = vmatprep.subr.mxu0 0.0
        %1453 = vmatpush1.msra.mxu0 0.0
        %1454 = vmatprep.subr.mxu0 0.0
        %1455 = vmatpush1.msra.mxu0 0.0
        %1456 = vmatprep.subr.mxu0 0.0
        %1457 = vmatpush1.msra.mxu0 0.0
        %1458 = vmatprep.subr.mxu0 0.0
        %1459 = vmatpush1.msra.mxu0 0.0
        %1460 = vmatprep.subr.mxu0 0.0
        %1461 = vmatpush1.msra.mxu0 0.0
        %1462 = vmatprep.subr.mxu0 0.0
        %1463 = vmatpush1.msra.mxu0 %v1132
        %1464 = vmatprep.subr.mxu0 0.0
        %1465 = vmatpush1.msra.mxu0 %v1130
        %1466 = vmatprep.subr.mxu0 0.0
        %1467 = vmatpush2.msra.mxu0 0.0
        %1468 = vmatprep.subr.mxu0 0.0
        %1469 = vmatpush2.msra.mxu0 0.0
        %1470 = vmatprep.subr.mxu0 0.0
        %1471 = vmatpush2.msra.mxu0 0.0
        %1472 = vmatprep.subr.mxu0 0.0
        %1473 = vmatpush2.msra.mxu0 0.0
        %1474 = vmatprep.subr.mxu0 0.0
        %1475 = vmatpush2.msra.mxu0 0.0
        %1476 = vmatprep.subr.mxu0 0.0
        %1477 = vmatpush2.msra.mxu0 0.0
        %1478 = vmatprep.subr.mxu0 0.0
        %1479 = vmatpush2.msra.mxu0 0.0
        %1480 = vmatprep.subr.mxu0 0.0
        %1481 = vmatpush2.msra.mxu0 0.0
        %1482 = vmatprep.subr.mxu0 0.0
        %1483 = vmatpush2.msra.mxu0 0.0
        %1484 = vmatprep.subr.mxu0 0.0
        %1485 = vmatpush2.msra.mxu0 0.0
        %1486 = vmatprep.subr.mxu0 0.0
        %1487 = vmatpush2.msra.mxu0 0.0
        %1488 = vmatprep.subr.mxu0 0.0
        %1489 = vmatpush2.msra.mxu0 0.0
        %1490 = vmatprep.subr.mxu0 0.0
        %1491 = vmatpush2.msra.mxu0 0.0
        %1492 = vmatprep.subr.mxu0 0.0
        %1493 = vmatpush2.msra.mxu0 0.0
        %1494 = vmatprep.subr.mxu0 0.0
        %1495 = vmatpush2.msra.mxu0 0.0
        %1496 = vmatprep.subr.mxu0 0.0
        %1497 = vmatpush2.msra.mxu0 0.0
        %1498 = vmatprep.mubr.f32.mxu0 0.0
        %1499 = vmatmul.mubr.f32.gmra.mxu0 %v1430
        %v1500 = vpop.f32.mrf.mxu0
        %v1501 = vadd.f32 0.0, %v1500
        %v1502 = vpop.f32.mrf.mxu0
        %1503 = vmatprep.mubr.f32.mxu0 0.0
        %1504 = vmatmul.mubr.f32.gmra.mxu0 %v1432
        %v1505 = vpop.f32.mrf.mxu0
        %v1506 = vadd.f32 0.0, %v1505
        %v1507 = vpop.f32.mrf.mxu0
        %1508 = vdwg.mxu0
        %v1509 = vadd.f32 %v1424, %v1501
        %v1510 = vadd.f32 %v1425, %v1506
        %v1511 = vld [vmem:[#allocation2 + $0x8] sm:$0xff]
        %v1512 = vld [vmem:[#allocation2 + $0x10] sm:$0xff]
        %v1513 = vld [vmem:[#allocation2 + $0x20] sm:$0xff]
        %v1514 = vld [vmem:[#allocation2 + $0x28] sm:$0xff]
        %1515 = vrot.lane.b32.xlu0 %v453, 64
        %v1516 = vpop.permute.xlu0 %1515
        %1517 = vrot.lane.b32.xlu0 %v454, 64
        %v1518 = vpop.permute.xlu0 %1517
        %1523 = vrot.lane.b32.xlu0 %v1511, 127
        %v1524 = vpop.permute.xlu0 %1523
        %1525 = vrot.lane.b32.xlu0 %v1512, 127
        %v1526 = vpop.permute.xlu0 %1525
        %1527 = vrot.lane.b32.xlu0 %v1513, 127
        %v1528 = vpop.permute.xlu0 %1527
        %1529 = vrot.lane.b32.xlu0 %v1514, 127
        %v1530 = vpop.permute.xlu0 %1529
        %vm1531 = vcmask 1039360
        %v1532 = vsel %vm1531, %v1524, %v1526
        %v1533 = vsel %vm1531, %v1528, %v1530
        %v1536 = vsel %vm1156, %v1516, 0
        %v1538 = vsel %vm1156, %v1518, 0
        %1540 = vmatprep.subr.mxu0 0.0
        %1541 = vmatpush1.msra.mxu0 0.0
        %1542 = vmatprep.subr.mxu0 0.0
        %1543 = vmatpush1.msra.mxu0 0.0
        %1544 = vmatprep.subr.mxu0 0.0
        %1545 = vmatpush1.msra.mxu0 0.0
        %1546 = vmatprep.subr.mxu0 0.0
        %1547 = vmatpush1.msra.mxu0 0.0
        %1548 = vmatprep.subr.mxu0 0.0
        %1549 = vmatpush1.msra.mxu0 0.0
        %1550 = vmatprep.subr.mxu0 0.0
        %1551 = vmatpush1.msra.mxu0 0.0
        %1552 = vmatprep.subr.mxu0 0.0
        %1553 = vmatpush1.msra.mxu0 0.0
        %1554 = vmatprep.subr.mxu0 0.0
        %1555 = vmatpush1.msra.mxu0 0.0
        %1556 = vmatprep.subr.mxu0 0.0
        %1557 = vmatpush1.msra.mxu0 0.0
        %1558 = vmatprep.subr.mxu0 0.0
        %1559 = vmatpush1.msra.mxu0 0.0
        %1560 = vmatprep.subr.mxu0 0.0
        %1561 = vmatpush1.msra.mxu0 0.0
        %1562 = vmatprep.subr.mxu0 0.0
        %1563 = vmatpush1.msra.mxu0 0.0
        %1564 = vmatprep.subr.mxu0 0.0
        %1565 = vmatpush1.msra.mxu0 0.0
        %1566 = vmatprep.subr.mxu0 0.0
        %1567 = vmatpush1.msra.mxu0 0.0
        %1568 = vmatprep.subr.mxu0 0.0
        %1569 = vmatpush1.msra.mxu0 %v1533
        %1570 = vmatprep.subr.mxu0 0.0
        %1571 = vmatpush1.msra.mxu0 %v1532
        %1572 = vmatprep.subr.mxu0 0.0
        %1573 = vmatpush2.msra.mxu0 0.0
        %1574 = vmatprep.subr.mxu0 0.0
        %1575 = vmatpush2.msra.mxu0 0.0
        %1576 = vmatprep.subr.mxu0 0.0
        %1577 = vmatpush2.msra.mxu0 0.0
        %1578 = vmatprep.subr.mxu0 0.0
        %1579 = vmatpush2.msra.mxu0 0.0
        %1580 = vmatprep.subr.mxu0 0.0
        %1581 = vmatpush2.msra.mxu0 0.0
        %1582 = vmatprep.subr.mxu0 0.0
        %1583 = vmatpush2.msra.mxu0 0.0
        %1584 = vmatprep.subr.mxu0 0.0
        %1585 = vmatpush2.msra.mxu0 0.0
        %1586 = vmatprep.subr.mxu0 0.0
        %1587 = vmatpush2.msra.mxu0 0.0
        %1588 = vmatprep.subr.mxu0 0.0
        %1589 = vmatpush2.msra.mxu0 0.0
        %1590 = vmatprep.subr.mxu0 0.0
        %1591 = vmatpush2.msra.mxu0 0.0
        %1592 = vmatprep.subr.mxu0 0.0
        %1593 = vmatpush2.msra.mxu0 0.0
        %1594 = vmatprep.subr.mxu0 0.0
        %1595 = vmatpush2.msra.mxu0 0.0
        %1596 = vmatprep.subr.mxu0 0.0
        %1597 = vmatpush2.msra.mxu0 0.0
        %1598 = vmatprep.subr.mxu0 0.0
        %1599 = vmatpush2.msra.mxu0 0.0
        %1600 = vmatprep.subr.mxu0 0.0
        %1601 = vmatpush2.msra.mxu0 0.0
        %1602 = vmatprep.subr.mxu0 0.0
        %1603 = vmatpush2.msra.mxu0 0.0
        %1604 = vmatprep.mubr.f32.mxu0 0.0
        %1605 = vmatmul.mubr.f32.gmra.mxu0 %v1536
        %v1606 = vpop.f32.mrf.mxu0
        %v1607 = vadd.f32 0.0, %v1606
        %v1608 = vpop.f32.mrf.mxu0
        %1609 = vmatprep.mubr.f32.mxu0 0.0
        %1610 = vmatmul.mubr.f32.gmra.mxu0 %v1538
        %v1611 = vpop.f32.mrf.mxu0
        %v1612 = vadd.f32 0.0, %v1611
        %v1613 = vpop.f32.mrf.mxu0
        %1614 = vdwg.mxu0
        %v1615 = vadd.f32 %v1509, %v1607
        %v1616 = vadd.f32 %v1510, %v1612
        %1617 = vrot.lane.b32.xlu0 %v453, 48
        %v1618 = vpop.permute.xlu0 %1617
        %1619 = vrot.lane.b32.xlu0 %v454, 48
        %v1620 = vpop.permute.xlu0 %1619
        %1621 = vrot.lane.b32.xlu0 %v1511, 126
        %v1622 = vpop.permute.xlu0 %1621
        %1623 = vrot.lane.b32.xlu0 %v1512, 126
        %v1624 = vpop.permute.xlu0 %1623
        %1625 = vrot.lane.b32.xlu0 %v1513, 126
        %v1626 = vpop.permute.xlu0 %1625
        %1627 = vrot.lane.b32.xlu0 %v1514, 126
        %v1628 = vpop.permute.xlu0 %1627
        %vm1629 = vcmask 1031168
        %v1630 = vsel %vm1629, %v1622, %v1624
        %v1631 = vsel %vm1629, %v1626, %v1628
        %v1634 = vsel %vm1156, %v1618, 0
        %v1636 = vsel %vm1156, %v1620, 0
        %1638 = vmatprep.subr.mxu0 0.0
        %1639 = vmatpush1.msra.mxu0 0.0
        %1640 = vmatprep.subr.mxu0 0.0
        %1641 = vmatpush1.msra.mxu0 0.0
        %1642 = vmatprep.subr.mxu0 0.0
        %1643 = vmatpush1.msra.mxu0 0.0
        %1644 = vmatprep.subr.mxu0 0.0
        %1645 = vmatpush1.msra.mxu0 0.0
        %1646 = vmatprep.subr.mxu0 0.0
        %1647 = vmatpush1.msra.mxu0 0.0
        %1648 = vmatprep.subr.mxu0 0.0
        %1649 = vmatpush1.msra.mxu0 0.0
        %1650 = vmatprep.subr.mxu0 0.0
        %1651 = vmatpush1.msra.mxu0 0.0
        %1652 = vmatprep.subr.mxu0 0.0
        %1653 = vmatpush1.msra.mxu0 0.0
        %1654 = vmatprep.subr.mxu0 0.0
        %1655 = vmatpush1.msra.mxu0 0.0
        %1656 = vmatprep.subr.mxu0 0.0
        %1657 = vmatpush1.msra.mxu0 0.0
        %1658 = vmatprep.subr.mxu0 0.0
        %1659 = vmatpush1.msra.mxu0 0.0
        %1660 = vmatprep.subr.mxu0 0.0
        %1661 = vmatpush1.msra.mxu0 0.0
        %1662 = vmatprep.subr.mxu0 0.0
        %1663 = vmatpush1.msra.mxu0 0.0
        %1664 = vmatprep.subr.mxu0 0.0
        %1665 = vmatpush1.msra.mxu0 0.0
        %1666 = vmatprep.subr.mxu0 0.0
        %1667 = vmatpush1.msra.mxu0 %v1631
        %1668 = vmatprep.subr.mxu0 0.0
        %1669 = vmatpush1.msra.mxu0 %v1630
        %1670 = vmatprep.subr.mxu0 0.0
        %1671 = vmatpush2.msra.mxu0 0.0
        %1672 = vmatprep.subr.mxu0 0.0
        %1673 = vmatpush2.msra.mxu0 0.0
        %1674 = vmatprep.subr.mxu0 0.0
        %1675 = vmatpush2.msra.mxu0 0.0
        %1676 = vmatprep.subr.mxu0 0.0
        %1677 = vmatpush2.msra.mxu0 0.0
        %1678 = vmatprep.subr.mxu0 0.0
        %1679 = vmatpush2.msra.mxu0 0.0
        %1680 = vmatprep.subr.mxu0 0.0
        %1681 = vmatpush2.msra.mxu0 0.0
        %1682 = vmatprep.subr.mxu0 0.0
        %1683 = vmatpush2.msra.mxu0 0.0
        %1684 = vmatprep.subr.mxu0 0.0
        %1685 = vmatpush2.msra.mxu0 0.0
        %1686 = vmatprep.subr.mxu0 0.0
        %1687 = vmatpush2.msra.mxu0 0.0
        %1688 = vmatprep.subr.mxu0 0.0
        %1689 = vmatpush2.msra.mxu0 0.0
        %1690 = vmatprep.subr.mxu0 0.0
        %1691 = vmatpush2.msra.mxu0 0.0
        %1692 = vmatprep.subr.mxu0 0.0
        %1693 = vmatpush2.msra.mxu0 0.0
        %1694 = vmatprep.subr.mxu0 0.0
        %1695 = vmatpush2.msra.mxu0 0.0
        %1696 = vmatprep.subr.mxu0 0.0
        %1697 = vmatpush2.msra.mxu0 0.0
        %1698 = vmatprep.subr.mxu0 0.0
        %1699 = vmatpush2.msra.mxu0 0.0
        %1700 = vmatprep.subr.mxu0 0.0
        %1701 = vmatpush2.msra.mxu0 0.0
        %1702 = vmatprep.mubr.f32.mxu0 0.0
        %1703 = vmatmul.mubr.f32.gmra.mxu0 %v1634
        %v1704 = vpop.f32.mrf.mxu0
        %v1705 = vadd.f32 0.0, %v1704
        %v1706 = vpop.f32.mrf.mxu0
        %1707 = vmatprep.mubr.f32.mxu0 0.0
        %1708 = vmatmul.mubr.f32.gmra.mxu0 %v1636
        %v1709 = vpop.f32.mrf.mxu0
        %v1710 = vadd.f32 0.0, %v1709
        %v1711 = vpop.f32.mrf.mxu0
        %1712 = vdwg.mxu0
        %v1713 = vadd.f32 %v1615, %v1705
        %v1714 = vadd.f32 %v1616, %v1710
        %1715 = vrot.lane.b32.xlu0 %v453, 32
        %v1716 = vpop.permute.xlu0 %1715
        %1717 = vrot.lane.b32.xlu0 %v454, 32
        %v1718 = vpop.permute.xlu0 %1717
        %1719 = vrot.lane.b32.xlu0 %v1511, 125
        %v1720 = vpop.permute.xlu0 %1719
        %1721 = vrot.lane.b32.xlu0 %v1512, 125
        %v1722 = vpop.permute.xlu0 %1721
        %1723 = vrot.lane.b32.xlu0 %v1513, 125
        %v1724 = vpop.permute.xlu0 %1723
        %1725 = vrot.lane.b32.xlu0 %v1514, 125
        %v1726 = vpop.permute.xlu0 %1725
        %vm1727 = vcmask 1022976
        %v1728 = vsel %vm1727, %v1720, %v1722
        %v1729 = vsel %vm1727, %v1724, %v1726
        %v1732 = vsel %vm1156, %v1716, 0
        %v1734 = vsel %vm1156, %v1718, 0
        %1736 = vmatprep.subr.mxu0 0.0
        %1737 = vmatpush1.msra.mxu0 0.0
        %1738 = vmatprep.subr.mxu0 0.0
        %1739 = vmatpush1.msra.mxu0 0.0
        %1740 = vmatprep.subr.mxu0 0.0
        %1741 = vmatpush1.msra.mxu0 0.0
        %1742 = vmatprep.subr.mxu0 0.0
        %1743 = vmatpush1.msra.mxu0 0.0
        %1744 = vmatprep.subr.mxu0 0.0
        %1745 = vmatpush1.msra.mxu0 0.0
        %1746 = vmatprep.subr.mxu0 0.0
        %1747 = vmatpush1.msra.mxu0 0.0
        %1748 = vmatprep.subr.mxu0 0.0
        %1749 = vmatpush1.msra.mxu0 0.0
        %1750 = vmatprep.subr.mxu0 0.0
        %1751 = vmatpush1.msra.mxu0 0.0
        %1752 = vmatprep.subr.mxu0 0.0
        %1753 = vmatpush1.msra.mxu0 0.0
        %1754 = vmatprep.subr.mxu0 0.0
        %1755 = vmatpush1.msra.mxu0 0.0
        %1756 = vmatprep.subr.mxu0 0.0
        %1757 = vmatpush1.msra.mxu0 0.0
        %1758 = vmatprep.subr.mxu0 0.0
        %1759 = vmatpush1.msra.mxu0 0.0
        %1760 = vmatprep.subr.mxu0 0.0
        %1761 = vmatpush1.msra.mxu0 0.0
        %1762 = vmatprep.subr.mxu0 0.0
        %1763 = vmatpush1.msra.mxu0 0.0
        %1764 = vmatprep.subr.mxu0 0.0
        %1765 = vmatpush1.msra.mxu0 %v1729
        %1766 = vmatprep.subr.mxu0 0.0
        %1767 = vmatpush1.msra.mxu0 %v1728
        %1768 = vmatprep.subr.mxu0 0.0
        %1769 = vmatpush2.msra.mxu0 0.0
        %1770 = vmatprep.subr.mxu0 0.0
        %1771 = vmatpush2.msra.mxu0 0.0
        %1772 = vmatprep.subr.mxu0 0.0
        %1773 = vmatpush2.msra.mxu0 0.0
        %1774 = vmatprep.subr.mxu0 0.0
        %1775 = vmatpush2.msra.mxu0 0.0
        %1776 = vmatprep.subr.mxu0 0.0
        %1777 = vmatpush2.msra.mxu0 0.0
        %1778 = vmatprep.subr.mxu0 0.0
        %1779 = vmatpush2.msra.mxu0 0.0
        %1780 = vmatprep.subr.mxu0 0.0
        %1781 = vmatpush2.msra.mxu0 0.0
        %1782 = vmatprep.subr.mxu0 0.0
        %1783 = vmatpush2.msra.mxu0 0.0
        %1784 = vmatprep.subr.mxu0 0.0
        %1785 = vmatpush2.msra.mxu0 0.0
        %1786 = vmatprep.subr.mxu0 0.0
        %1787 = vmatpush2.msra.mxu0 0.0
        %1788 = vmatprep.subr.mxu0 0.0
        %1789 = vmatpush2.msra.mxu0 0.0
        %1790 = vmatprep.subr.mxu0 0.0
        %1791 = vmatpush2.msra.mxu0 0.0
        %1792 = vmatprep.subr.mxu0 0.0
        %1793 = vmatpush2.msra.mxu0 0.0
        %1794 = vmatprep.subr.mxu0 0.0
        %1795 = vmatpush2.msra.mxu0 0.0
        %1796 = vmatprep.subr.mxu0 0.0
        %1797 = vmatpush2.msra.mxu0 0.0
        %1798 = vmatprep.subr.mxu0 0.0
        %1799 = vmatpush2.msra.mxu0 0.0
        %1800 = vmatprep.mubr.f32.mxu0 0.0
        %1801 = vmatmul.mubr.f32.gmra.mxu0 %v1732
        %v1802 = vpop.f32.mrf.mxu0
        %v1803 = vadd.f32 0.0, %v1802
        %v1804 = vpop.f32.mrf.mxu0
        %1805 = vmatprep.mubr.f32.mxu0 0.0
        %1806 = vmatmul.mubr.f32.gmra.mxu0 %v1734
        %v1807 = vpop.f32.mrf.mxu0
        %v1808 = vadd.f32 0.0, %v1807
        %v1809 = vpop.f32.mrf.mxu0
        %1810 = vdwg.mxu0
        %v1811 = vadd.f32 %v1713, %v1803
        %v1812 = vadd.f32 %v1714, %v1808
        %1814 = vset.pattern.permute.xlu0 0
        %1815 = vperm.xlu0 %1814, %v447
        %v1816 = vpop.permute.xlu0 %1815
        %1819 = vset.pattern.permute.xlu0 0
        %1820 = vperm.xlu0 %1819, %v448
        %v1821 = vpop.permute.xlu0 %1820
        %v1823 = vadd.f32 %v1811, %v1816
        %v1824 = vadd.f32 %v1812, %v1821
        %1826 = vset.pattern.permute.xlu0 0
        %1827 = vperm.xlu0 %1826, %v443
        %v1828 = vpop.permute.xlu0 %1827
        %1831 = vset.pattern.permute.xlu0 0
        %1832 = vperm.xlu0 %1831, %v444
        %v1833 = vpop.permute.xlu0 %1832
        %v1835 = vadd.f32 %v1823, %v1828
        %v1836 = vadd.f32 %v1824, %v1833
        %1838 = vset.pattern.permute.xlu0 0
        %1839 = vperm.xlu0 %1838, %v445
        %v1840 = vpop.permute.xlu0 %1839
        %1843 = vset.pattern.permute.xlu0 0
        %1844 = vperm.xlu0 %1843, %v446
        %v1845 = vpop.permute.xlu0 %1844
        %v1847 = vmul.f32 %v1840, %v1823
        %v1848 = vmul.f32 %v1845, %v1824
        %v1849 = vand.u32 2147483647, %v1847
        %vm1850 = vcmp.le.f32.partialorder %v1849, 0.7853982
        %vm1851 = vcmp.lt.s32.totalorder %v1847, 0
        %v1852 = vand.u32 %v1847, 2139095040
        %v1853 = vshrl.u32 %v1852, 23
        %v1854 = vsub.s32 %v1853, 127
        %v1855 = vand.u32 2147483647, %v1847
        %v1856 = vand.u32 %v1855, 8388607
        %v1857 = vor.u32 %v1856, 8388608
        %v1858 = vsub.s32 0, %v1857
        %v1859 = vadd.s32 %v1854, 1
        %vm1860 = vcmp.gt.s32.totalorder %v1859, 0
        %v1861 = vsel %vm1860, %v1859, 0
        %v1862 = vshrl.u32 %v1861, 5
        %v1863 = vand.u32 %v1861, 31
        %v1864 = vsub.s32 32, %v1863
        %v1865 = vshrl.u32 683565275, %v1864
        %v1866 = vshll.u32 683565275, %v1863
        %v1867 = vshrl.u32 2475754826, %v1864
        %v1868 = vor.u32 %v1866, %v1867
        %v1869 = vshll.u32 2475754826, %v1863
        %v1870 = vshrl.u32 2131351028, %v1864
        %v1871 = vor.u32 %v1869, %v1870
        %v1872 = vshll.u32 2131351028, %v1863
        %v1873 = vshrl.u32 2102212464, %v1864
        %v1874 = vor.u32 %v1872, %v1873
        %v1875 = vshll.u32 2102212464, %v1863
        %v1876 = vshrl.u32 920167782, %v1864
        %v1877 = vor.u32 %v1875, %v1876
        %v1878 = vshll.u32 920167782, %v1863
        %v1879 = vshrl.u32 1326507024, %v1864
        %v1880 = vor.u32 %v1878, %v1879
        %vm1881 = vcmp.lt.s32.totalorder %v1862, 1
        %vm1882 = vcmp.lt.s32.totalorder %v1862, 2
        %vm1883 = vcmp.lt.s32.totalorder %v1862, 3
        %vm1884 = vcmp.lt.s32.totalorder %v1862, 4
        %v1885 = vsel %vm1881, %v1865, %v1868
        %v1886 = vsel %vm1884, %v1874, 2102212464
        %v1887 = vsel %vm1883, %v1871, %v1886
        %v1888 = vsel %vm1882, %v1885, %v1887
        %v1889 = vsel %vm1881, %v1868, %v1871
        %v1890 = vsel %vm1884, %v1877, 920167782
        %v1891 = vsel %vm1883, %v1874, %v1890
        %v1892 = vsel %vm1882, %v1889, %v1891
        %v1893 = vsel %vm1881, %v1871, %v1874
        %v1894 = vsel %vm1884, %v1880, 1326507024
        %v1895 = vsel %vm1883, %v1877, %v1894
        %v1896 = vsel %vm1882, %v1893, %v1895
        %v1897 = vshll.u32 %v1857, 8
        %v1898 = vmul.u32.u64.compose %v1897, %v1896
        %v1899 = vextract.low.u32 %v1898
        %v1900 = vextract.high.u32 %v1898
        %v1901 = vmul.u32.u64.compose %v1897, %v1892
        %v1902 = vextract.low.u32 %v1901
        %v1903 = vextract.high.u32 %v1901
        %v1904 = vmul.u32 %v1897, %v1888
        %v1905 = vadd.s32 %v1900, %v1902
        %vm1906 = vc.u32 %v1900, %v1902
        %v1907 = vadd.s32 %v1903, 1
        %v1908 = vsel %vm1906, %v1907, %v1903
        %v1909 = vadd.s32 %v1904, %v1908
        %v1910 = vadd.s32 %v1909, 536870912
        %v1911 = vshrl.u32 %v1910, 30
        %v1912 = vshll.u32 %v1911, 30
        %v1913 = vsub.s32 %v1909, %v1912
        %vm1914 = vcmp.lt.s32.totalorder %v1913, 0
        %v1915 = vsub.s32 0, %v1913
        %v1916 = vsel %vm1914, %v1915, %v1913
        %v1917 = vclz %v1916
        %v1918 = vsub.s32 %v1917, 2
        %vm1919 = vcmp.gt.s32.totalorder 0, %v1918
        %v1920 = vsel %vm1919, 0, %v1918
        %v1921 = vsub.s32 32, %v1920
        %v1922 = vshll.u32 %v1913, %v1920
        %v1923 = vshrl.u32 %v1905, %v1921
        %v1924 = vor.u32 %v1922, %v1923
        %v1925 = vsub.s32 4294967266, %v1920
        %v1926 = vadd.s32 %v1925, 127
        %v1927 = vshll.u32 %v1926, 23
        %v1928 = vor.u32 4788187, %v1927
        %v1929 = vand.u32 2147483647, %v1928
        %v1931 = vcvt.s32.f32 %v1924
        %v1932 = vmul.f32 %v1931, %v1929
        %v1933 = vxor.u32 %v1932, 2147483648
        %v1934 = vsel %vm1851, %v1933, %v1932
        %v1935 = vsub.s32 4, %v1911
        %v1936 = vsel %vm1851, %v1935, %v1911
        %v1937 = vsel %vm1850, %v1847, %v1934
        %v1938 = vsel %vm1850, 0, %v1936
        %v1939 = vcosq.f32.pop %v1937
        %v1940 = vsinq.f32.pop %v1937
        %vm1941 = vweird.f32 %v1847
        %v1942 = vand.u32 %v1938, 3
        %vm1943 = vcmp.lt.s32.totalorder %v1942, 2
        %vm1944 = vcmp.eq.s32.totalorder %v1942, 0
        %v1945 = vxor.u32 %v1940, 2147483648
        %v1946 = vsel %vm1944, %v1939, %v1945
        %vm1947 = vcmp.eq.s32.totalorder %v1942, 2
        %v1948 = vxor.u32 %v1939, 2147483648
        %v1949 = vsel %vm1947, %v1948, %v1940
        %v1950 = vsel %vm1943, %v1946, %v1949
        %v1951 = vsel %vm1941, nan, %v1950
        %v1952 = vand.u32 2147483647, %v1848
        %vm1953 = vcmp.le.f32.partialorder %v1952, 0.7853982
        %vm1954 = vcmp.lt.s32.totalorder %v1848, 0
        %v1955 = vand.u32 %v1848, 2139095040
        %v1956 = vshrl.u32 %v1955, 23
        %v1957 = vsub.s32 %v1956, 127
        %v1958 = vand.u32 2147483647, %v1848
        %v1959 = vand.u32 %v1958, 8388607
        %v1960 = vor.u32 %v1959, 8388608
        %v1961 = vsub.s32 0, %v1960
        %v1962 = vadd.s32 %v1957, 1
        %vm1963 = vcmp.gt.s32.totalorder %v1962, 0
        %v1964 = vsel %vm1963, %v1962, 0
        %v1965 = vshrl.u32 %v1964, 5
        %v1966 = vand.u32 %v1964, 31
        %v1967 = vsub.s32 32, %v1966
        %v1968 = vshrl.u32 683565275, %v1967
        %v1969 = vshll.u32 683565275, %v1966
        %v1970 = vshrl.u32 2475754826, %v1967
        %v1971 = vor.u32 %v1969, %v1970
        %v1972 = vshll.u32 2475754826, %v1966
        %v1973 = vshrl.u32 2131351028, %v1967
        %v1974 = vor.u32 %v1972, %v1973
        %v1975 = vshll.u32 2131351028, %v1966
        %v1976 = vshrl.u32 2102212464, %v1967
        %v1977 = vor.u32 %v1975, %v1976
        %v1978 = vshll.u32 2102212464, %v1966
        %v1979 = vshrl.u32 920167782, %v1967
        %v1980 = vor.u32 %v1978, %v1979
        %v1981 = vshll.u32 920167782, %v1966
        %v1982 = vshrl.u32 1326507024, %v1967
        %v1983 = vor.u32 %v1981, %v1982
        %vm1984 = vcmp.lt.s32.totalorder %v1965, 1
        %vm1985 = vcmp.lt.s32.totalorder %v1965, 2
        %vm1986 = vcmp.lt.s32.totalorder %v1965, 3
        %vm1987 = vcmp.lt.s32.totalorder %v1965, 4
        %v1988 = vsel %vm1984, %v1968, %v1971
        %v1989 = vsel %vm1987, %v1977, 2102212464
        %v1990 = vsel %vm1986, %v1974, %v1989
        %v1991 = vsel %vm1985, %v1988, %v1990
        %v1992 = vsel %vm1984, %v1971, %v1974
        %v1993 = vsel %vm1987, %v1980, 920167782
        %v1994 = vsel %vm1986, %v1977, %v1993
        %v1995 = vsel %vm1985, %v1992, %v1994
        %v1996 = vsel %vm1984, %v1974, %v1977
        %v1997 = vsel %vm1987, %v1983, 1326507024
        %v1998 = vsel %vm1986, %v1980, %v1997
        %v1999 = vsel %vm1985, %v1996, %v1998
        %v2000 = vshll.u32 %v1960, 8
        %v2001 = vmul.u32.u64.compose %v2000, %v1999
        %v2002 = vextract.low.u32 %v2001
        %v2003 = vextract.high.u32 %v2001
        %v2004 = vmul.u32.u64.compose %v2000, %v1995
        %v2005 = vextract.low.u32 %v2004
        %v2006 = vextract.high.u32 %v2004
        %v2007 = vmul.u32 %v2000, %v1991
        %v2008 = vadd.s32 %v2003, %v2005
        %vm2009 = vc.u32 %v2003, %v2005
        %v2010 = vadd.s32 %v2006, 1
        %v2011 = vsel %vm2009, %v2010, %v2006
        %v2012 = vadd.s32 %v2007, %v2011
        %v2013 = vadd.s32 %v2012, 536870912
        %v2014 = vshrl.u32 %v2013, 30
        %v2015 = vshll.u32 %v2014, 30
        %v2016 = vsub.s32 %v2012, %v2015
        %vm2017 = vcmp.lt.s32.totalorder %v2016, 0
        %v2018 = vsub.s32 0, %v2016
        %v2019 = vsel %vm2017, %v2018, %v2016
        %v2020 = vclz %v2019
        %v2021 = vsub.s32 %v2020, 2
        %vm2022 = vcmp.gt.s32.totalorder 0, %v2021
        %v2023 = vsel %vm2022, 0, %v2021
        %v2024 = vsub.s32 32, %v2023
        %v2025 = vshll.u32 %v2016, %v2023
        %v2026 = vshrl.u32 %v2008, %v2024
        %v2027 = vor.u32 %v2025, %v2026
        %v2028 = vsub.s32 4294967266, %v2023
        %v2029 = vadd.s32 %v2028, 127
        %v2030 = vshll.u32 %v2029, 23
        %v2031 = vor.u32 4788187, %v2030
        %v2032 = vand.u32 2147483647, %v2031
        %v2034 = vcvt.s32.f32 %v2027
        %v2035 = vmul.f32 %v2034, %v2032
        %v2036 = vxor.u32 %v2035, 2147483648
        %v2037 = vsel %vm1954, %v2036, %v2035
        %v2038 = vsub.s32 4, %v2014
        %v2039 = vsel %vm1954, %v2038, %v2014
        %v2040 = vsel %vm1953, %v1848, %v2037
        %v2041 = vsel %vm1953, 0, %v2039
        %v2042 = vcosq.f32.pop %v2040
        %v2043 = vsinq.f32.pop %v2040
        %vm2044 = vweird.f32 %v1848
        %v2045 = vand.u32 %v2041, 3
        %vm2046 = vcmp.lt.s32.totalorder %v2045, 2
        %vm2047 = vcmp.eq.s32.totalorder %v2045, 0
        %v2048 = vxor.u32 %v2043, 2147483648
        %v2049 = vsel %vm2047, %v2042, %v2048
        %vm2050 = vcmp.eq.s32.totalorder %v2045, 2
        %v2051 = vxor.u32 %v2042, 2147483648
        %v2052 = vsel %vm2050, %v2051, %v2043
        %v2053 = vsel %vm2046, %v2049, %v2052
        %v2054 = vsel %vm2044, nan, %v2053
        %v2055 = vmul.f32 %v1828, %v1951
        %v2056 = vmul.f32 %v1833, %v2054
        %v2057 = vsub.f32 %v1835, %v2055
        %v2058 = vsub.f32 %v1836, %v2056
        %2060 = vset.pattern.permute.xlu0 0
        %2061 = vperm.xlu0 %2060, %v449
        %v2062 = vpop.permute.xlu0 %2061
        %2065 = vset.pattern.permute.xlu0 0
        %2066 = vperm.xlu0 %2065, %v450
        %v2067 = vpop.permute.xlu0 %2066
        %v2070 = vsel %vm1156, %v451, 0
        %v2073 = vsel %vm1156, %v452, 0
        %2075 = vmatprep.subr.mxu0 0.0
        %2076 = vmatpush1.msra.mxu0 0.0
        %2077 = vmatprep.subr.mxu0 0.0
        %2078 = vmatpush1.msra.mxu0 0.0
        %2079 = vmatprep.subr.mxu0 0.0
        %2080 = vmatpush1.msra.mxu0 0.0
        %2081 = vmatprep.subr.mxu0 0.0
        %2082 = vmatpush1.msra.mxu0 0.0
        %2083 = vmatprep.subr.mxu0 0.0
        %2084 = vmatpush1.msra.mxu0 0.0
        %2085 = vmatprep.subr.mxu0 0.0
        %2086 = vmatpush1.msra.mxu0 0.0
        %2087 = vmatprep.subr.mxu0 0.0
        %2088 = vmatpush1.msra.mxu0 0.0
        %2089 = vmatprep.subr.mxu0 0.0
        %2090 = vmatpush1.msra.mxu0 0.0
        %2091 = vmatprep.subr.mxu0 0.0
        %2092 = vmatpush1.msra.mxu0 0.0
        %2093 = vmatprep.subr.mxu0 0.0
        %2094 = vmatpush1.msra.mxu0 0.0
        %2095 = vmatprep.subr.mxu0 0.0
        %2096 = vmatpush1.msra.mxu0 0.0
        %2097 = vmatprep.subr.mxu0 0.0
        %2098 = vmatpush1.msra.mxu0 0.0
        %2099 = vmatprep.subr.mxu0 0.0
        %2100 = vmatpush1.msra.mxu0 0.0
        %2101 = vmatprep.subr.mxu0 0.0
        %2102 = vmatpush1.msra.mxu0 0.0
        %2103 = vmatprep.subr.mxu0 0.0
        %2104 = vmatpush1.msra.mxu0 %v2058
        %2105 = vmatprep.subr.mxu0 0.0
        %2106 = vmatpush1.msra.mxu0 %v2057
        %2107 = vmatprep.subr.mxu0 0.0
        %2108 = vmatpush2.msra.mxu0 0.0
        %2109 = vmatprep.subr.mxu0 0.0
        %2110 = vmatpush2.msra.mxu0 0.0
        %2111 = vmatprep.subr.mxu0 0.0
        %2112 = vmatpush2.msra.mxu0 0.0
        %2113 = vmatprep.subr.mxu0 0.0
        %2114 = vmatpush2.msra.mxu0 0.0
        %2115 = vmatprep.subr.mxu0 0.0
        %2116 = vmatpush2.msra.mxu0 0.0
        %2117 = vmatprep.subr.mxu0 0.0
        %2118 = vmatpush2.msra.mxu0 0.0
        %2119 = vmatprep.subr.mxu0 0.0
        %2120 = vmatpush2.msra.mxu0 0.0
        %2121 = vmatprep.subr.mxu0 0.0
        %2122 = vmatpush2.msra.mxu0 0.0
        %2123 = vmatprep.subr.mxu0 0.0
        %2124 = vmatpush2.msra.mxu0 0.0
        %2125 = vmatprep.subr.mxu0 0.0
        %2126 = vmatpush2.msra.mxu0 0.0
        %2127 = vmatprep.subr.mxu0 0.0
        %2128 = vmatpush2.msra.mxu0 0.0
        %2129 = vmatprep.subr.mxu0 0.0
        %2130 = vmatpush2.msra.mxu0 0.0
        %2131 = vmatprep.subr.mxu0 0.0
        %2132 = vmatpush2.msra.mxu0 0.0
        %2133 = vmatprep.subr.mxu0 0.0
        %2134 = vmatpush2.msra.mxu0 0.0
        %2135 = vmatprep.subr.mxu0 0.0
        %2136 = vmatpush2.msra.mxu0 0.0
        %2137 = vmatprep.subr.mxu0 0.0
        %2138 = vmatpush2.msra.mxu0 0.0
        %2139 = vmatprep.mubr.f32.mxu0 0.0
        %2140 = vmatmul.mubr.f32.gmra.mxu0 %v2070
        %v2141 = vpop.f32.mrf.mxu0
        %v2142 = vadd.f32 %v2062, %v2141
        %v2143 = vpop.f32.mrf.mxu0
        %2144 = vmatprep.mubr.f32.mxu0 0.0
        %2145 = vmatmul.mubr.f32.gmra.mxu0 %v2073
        %v2146 = vpop.f32.mrf.mxu0
        %v2147 = vadd.f32 %v2067, %v2146
        %v2148 = vpop.f32.mrf.mxu0
        %2149 = vdwg.mxu0
        %v2150 = vld [vmem:[%s388] sm:$0xff]
        %v2151 = vld [vmem:[%s388 + $0x8] sm:$0xff]
        %v2152 = vadd.f32 %v2150, %v2142
        %v2153 = vadd.f32 %v2151, %v2147
        %2154 = vst [vmem:[%s438] sm:$0xff] %v2152
        %2155 = vst [vmem:[%s438 + $0x8] sm:$0xff] %v2153
        %s2156 = sand.u32 %s276, 1
        %s2157 = scalar_lea.sflag [#allocation5], %s2156
        %s2158 = sand.u32 %s276, 1
        %s2159 = smul.addr %s2158, 16
        %s2160 = scalar_lea.vmem [#allocation8], %s2159
        // Predicated region
        $region69: #{tpu_custom_call.1} parent=59 // pred_check
          %p2161 = pneg %p286
        $region70: #{tpu_custom_call.1} parent=59 // pred_check_branch
          %2163 = sbr.rel (%p2161) target = $region72
        $region71: #{tpu_custom_call.1} parent=59 // pred_region
          %s2165 = ssub.s32 256, 256
          %2166 = vsyncadd %s2157, %s2165
          %s2167 = smul.addr %s34, 16
          %s2168 = sadd.s32 %s35, %s2167
          %s2169 = smul.addr %s2168, 128
          %s2170 = scalar_lea.hbm %s10, %s2169
          %s2171 = sshll.u32 %s2160, 4
          %s2172 = int_to_ptr.vmem [resolvable:$true] %s2171
          %2177 = dma.vmem_to_hbm [thread:$0]  %s2172, 256, %s2170, %s2157, 128, 1024, 8
        $region72: #{tpu_custom_call.1} parent=59 // pred_fallthru
          _
      $region60: #{tpu_custom_call.1} parent=5 // pred_fallthru
        _
      %p2178 = scmp.le.s32.totalorder 2, %s25
      // Predicated region
      $region73: #{tpu_custom_call.1} parent=5 // pred_check
        %p2179 = pneg %p2178
      $region74: #{tpu_custom_call.1} parent=5 // pred_check_branch
        %2181 = sbr.rel (%p2179) target = $region76
      $region75: #{tpu_custom_call.1} parent=5 // pred_region
        %s2182 = ssub.s32 %s25, 2
        // Predicated region
        $region77: #{tpu_custom_call.1} parent=75 // pred_check
          %p2183 = pneg %p292
        $region78: #{tpu_custom_call.1} parent=75 // pred_check_branch
          %2185 = sbr.rel (%p2183) target = $region80
        $region79: #{tpu_custom_call.1} parent=75 // pred_region
          %s2186 = sand.u32 %s277, 1
          %s2187 = scalar_lea.sflag [#allocation5], %s2186
          %s2188 = sand.u32 %s277, 1
          %s2189 = smul.addr %s2188, 16
          %s2190 = scalar_lea.vmem [#allocation8], %s2189
          %2191 = dma.done %s2187, 256
        $region80: #{tpu_custom_call.1} parent=75 // pred_fallthru
          _
      $region76: #{tpu_custom_call.1} parent=5 // pred_fallthru
        _
    $region6: #{tpu_custom_call.1} parent=1 // loop_footer
      %s29 = sadd.s32 1, %s25
    $region7: #{tpu_custom_call.1} parent=1 // loop_footer_branch
      %24 = sbr.rel target = $region3
    $region8: #{tpu_custom_call.1} parent=1 // loop_exit
      _
    %2192 = vsyncpa [#allocation4], 1
    %s2193 = scalar_lea.sflag [#allocation4], 1
    %2194 = vsyncpa %s2193, 1
    %2195 = vsyncpa [#allocation7], 1
    %s2196 = scalar_lea.sflag [#allocation7], 1
    %2197 = vsyncpa %s2196, 1
    %2198 = vsyncpa [#allocation5], 1
    %s2199 = scalar_lea.sflag [#allocation5], 1
    %2200 = vsyncpa %s2199, 1

</llo_original>
